<compile_context>
chip_gen: v7x
topology: tpu7x:2x2x1
jax: 0.10.0
libtpu: 0.0.40
codegen_flags: <defaults>
</compile_context>

<pallas_src>
import functools

import numpy as np
import jax
import jax.numpy as jnp
from jax.experimental import pallas as pl
from jax.experimental.pallas import tpu as pltpu

_LANES = 128


def _round_up(x, m):
    return (x + m - 1) // m * m


def _layer_geometry(bt, L, padding, shapes):
    """Static per-tile geometry + compact one-hot selection matrices.

    Each layer gets ONE selector of shape (W_in, W_out): row (n*S_in + 2*h) is
    routed to column (n*S_out + pad_out + h).  Combined with the in-kernel
    pairwise max of adjacent lanes it implements MaxPool1d(2,2), the re-stride to
    the next layer's per-sample length, and the next layer's zero padding in a
    single one-hot matmul.  `bt` is the per-grid-step batch tile, so selector
    size is independent of the total batch.
    """
    cfgs, sels = [], []
    n_layers = len(shapes)
    s_in = L + 2 * padding                        # per-sample padded length (layer 1)
    w_in = _round_up(bt * s_in, _LANES)           # lane width of one tile
    for li, (cin, cout, k) in enumerate(shapes):
        l_conv = s_in - k + 1                     # conv output length
        l_pool = l_conv // 2                      # MaxPool1d(2,2) floors (matches torch)
        last = li == n_layers - 1
        pad_out = 0 if last else padding
        s_out = l_pool + 2 * pad_out
        w_out = _round_up(bt * s_out, _LANES)
        se = np.zeros((w_in, w_out), np.float32)
        for n in range(bt):
            for h in range(l_pool):
                se[n * s_in + 2 * h, n * s_out + pad_out + h] = 1.0
        cfgs.append((k, cin, w_in))
        sels.append(se)
        s_in, w_in = s_out, w_out
    return cfgs, sels, s_in                       # s_in == final per-sample length


def _build_fused_kernel(cfgs):
    n_layers = len(cfgs)

    def kernel(*refs):
        x_ref = refs[0]
        w_refs = refs[1:1 + n_layers]
        se_refs = refs[1 + n_layers:1 + 2 * n_layers]
        o_ref = refs[-1]

        h = x_ref[...]                                     # (Cin0, W0): single lane-dense copy
        for (k_taps, cin, w_in), w_ref, se_ref in zip(cfgs, w_refs, se_refs):
            # BBBConv1d: tap_k[p] = h[p + k], built with an XLU lane rotation
            # (rotate right by W-k == shift left by k; wrapped lanes never reach a
            # valid conv output so they need no masking).  Each tap contributes a
            # small MXU matmul (Cin >= 2) or a VPU outer product (Cin == 1); the
            # accumulator is initialized from the k == 0 term.
            acc = None
            for k in range(k_taps):
                tap = h if k == 0 else pltpu.roll(h, shift=w_in - k, axis=1)
                wk = w_ref[k]                              # (Cout, Cin)
                if cin == 1:
                    part = wk * tap                        # (Cout,1)*(1,W) broadcast FMA
                else:
                    part = jnp.dot(wk, tap, preferred_element_type=jnp.float32)
                acc = part if acc is None else acc + part

            # Softplus (numerically stable; matches torch incl. threshold=20 branch
            # to well below 1e-4).
            y = jnp.maximum(acc, 0.0) + jnp.log(1.0 + jnp.exp(-jnp.abs(acc)))

            # MaxPool1d(2,2): pairwise max of adjacent lanes (one XLU roll + VPU max),
            # then ONE one-hot selection matmul (bf16 selector upcast in-register —
            # exact for 0/1) re-strides + zero-pads into the next layer's layout.
            z = jnp.maximum(y, pltpu.roll(y, shift=w_in - 1, axis=1))
            h = jnp.dot(z, se_ref[...].astype(jnp.float32),
                        preferred_element_type=jnp.float32)

        o_ref[...] = h                                     # (Cout_last, W_last): lane-dense

    return kernel


@functools.partial(jax.jit, static_argnums=(2,))
def oned_stack_forward(x, params, padding):
    """Forward of OneD_Stack: 3x (BBBConv1d -> Softplus -> MaxPool1d(2,2)) -> Flatten."""
    N, cin0, L = x.shape

    # Sampled Bayesian weights (w = mu + sigma*eps) and KL(q || N(0,1)) — tiny, plain JAX.
    # TODO(synk): BBBConv1d bias terms / per-forward eps resampling not modeled (source not given).
    wstacks, shapes = [], []
    kl = jnp.float32(0.0)
    for (mu, log_sigma, eps) in params:
        sigma = jnp.exp(log_sigma)
        w = mu + sigma * eps                               # (Cout, Cin, K)
        cout, cin, k = w.shape
        wstacks.append(jnp.transpose(w, (2, 0, 1)).astype(jnp.float32))   # (K, Cout, Cin)
        shapes.append((cin, cout, k))
        kl = kl + jnp.sum(-log_sigma + 0.5 * (sigma ** 2 + mu ** 2) - 0.5)

    # Batch tiling: bt samples per grid step (~2 vregs of lanes per tile — tunable).
    # Selector size is now independent of N; remaining samples are zero-padded.
    s0 = L + 2 * padding
    bt = max(1, min(N, (256 + s0 - 1) // s0))
    num_tiles = -(-N // bt)
    n_pad = num_tiles * bt

    cfgs, sels_np, l_out = _layer_geometry(bt, L, padding, shapes)
    w0 = cfgs[0][2]
    cout_last = shapes[-1][1]
    w_last = _round_up(bt * l_out, _LANES)
    sels = [jnp.asarray(s, dtype=jnp.bfloat16) for s in sels_np]   # 0/1 exact in bf16

    # Layer-1 glue (traced once under jit): torch-style zero pad, fold the bt
    # samples of a tile into the lane axis (stride s0), round lanes up to 128.
    # Only ONE copy is shipped; the kernel builds the conv taps itself.
    xp = jnp.pad(x.astype(jnp.float32),
                 ((0, n_pad - N), (0, 0), (padding, padding)))
    xt = xp.reshape(num_tiles, bt, cin0, s0).transpose(0, 2, 1, 3)
    xt = xt.reshape(num_tiles, cin0, bt * s0)
    xt = jnp.pad(xt, ((0, 0), (0, 0), (0, w0 - bt * s0)))

    # Scoped-VMEM budget: double-buffered x/out tiles + resident weights/selectors
    # (+ their in-register f32 upcasts) + headroom for activations.
    x_bytes = cin0 * w0 * 4
    o_bytes = cout_last * w_last * 4
    w_bytes = sum(int(np.prod(w.shape)) * 4 for w in wstacks)
    s_bytes = sum(int(s.size) for s in sels_np) * 2
    needed = 2 * (x_bytes + o_bytes) + w_bytes + 3 * s_bytes + (2 << 20)
    vmem_limit = int(min(64 << 20, max(32 << 20, 2 * needed)))

    out = pl.pallas_call(
        _build_fused_kernel(tuple(cfgs)),
        out_shape=jax.ShapeDtypeStruct((num_tiles, cout_last, w_last), jnp.float32),
        grid=(num_tiles,),
        in_specs=(
            [pl.BlockSpec((None, cin0, w0), lambda i: (i, 0, 0))]
            + [pl.BlockSpec(w.shape, lambda i: (0, 0, 0)) for w in wstacks]
            + [pl.BlockSpec(s.shape, lambda i: (0, 0)) for s in sels]),
        out_specs=pl.BlockSpec((None, cout_last, w_last), lambda i: (i, 0, 0)),
        compiler_params=pltpu.CompilerParams(
            dimension_semantics=("parallel",),        # batch tiles -> both v7x TensorCores
            vmem_limit_bytes=vmem_limit),
    )(xt, *wstacks, *sels)

    # Un-fold the lane-packed output back to torch's x.view(N, -1) order.
    out = out[:, :, :bt * l_out].reshape(num_tiles, cout_last, bt, l_out)
    out = out.transpose(0, 2, 1, 3).reshape(n_pad, cout_last * l_out)
    return out[:N], kl


def _reference(x, params, padding):
    """Pure-JAX reference for correctness checking."""
    kl = jnp.float32(0.0)
    h = x
    for (mu, log_sigma, eps) in params:
        sigma = jnp.exp(log_sigma)
        w = mu + sigma * eps
        y = jax.lax.conv_general_dilated(
            h, w, window_strides=(1,), padding=[(padding, padding)],
            dimension_numbers=('NCH', 'OIH', 'NCH'))
        y = jax.nn.softplus(y)
        n, c, l = y.shape
        h = y[:, :, :(l // 2) * 2].reshape(n, c, l // 2, 2).max(axis=-1)
        kl = kl + jnp.sum(-log_sigma + 0.5 * (sigma ** 2 + mu ** 2) - 0.5)
    return h.reshape(h.shape[0], -1), kl


if __name__ == "__main__":
    kernel_size, feature_maps, padding = 3, 2, 1   # channels: 1 -> 2 -> 4 -> 8
    N, L = 8, 64                                   # small synthetic shapes (2 batch tiles)

    key = jax.random.PRNGKey(0)
    k_x, k_p = jax.random.split(key)
    x = jax.random.normal(k_x, (N, 1, L), dtype=jnp.float32)

    # Deterministic Bayesian-conv parameters for the 3 BBBConv1d layers.
    chans = [(1, feature_maps),
             (feature_maps, feature_maps ** 2),
             (feature_maps ** 2, feature_maps ** 3)]
    params = []
    pk = k_p
    for (ci, co) in chans:
        pk, k_mu, k_eps = jax.random.split(pk, 3)
        mu = 0.1 * jax.random.normal(k_mu, (co, ci, kernel_size), dtype=jnp.float32)
        log_sigma = jnp.full((co, ci, kernel_size), -3.0, dtype=jnp.float32)
        eps = jax.random.normal(k_eps, (co, ci, kernel_size), dtype=jnp.float32)
        params.append((mu, log_sigma, eps))

    out, kl = oned_stack_forward(x, params, padding)
    out = jax.block_until_ready(out)
    kl = jax.block_until_ready(kl)

    ref_out, ref_kl = _reference(x, params, padding)
    assert out.shape == (N, feature_maps ** 3 * (L // 8)), out.shape
    assert jnp.allclose(out, ref_out, atol=1e-4, rtol=1e-4), \
        float(jnp.max(jnp.abs(out - ref_out)))
    assert jnp.allclose(kl, ref_kl, atol=1e-4, rtol=1e-4)

    print("KERNEL_OK")
</pallas_src>

<mosaic_0001>
module attributes {stable_mosaic.version = 11 : i64} {
  func.func @kernel(%arg0: i32, %arg1: memref<1x1x384xf32, #tpu.memory_space<vmem>>, %arg2: memref<3x2x1xf32, #tpu.memory_space<vmem>>, %arg3: memref<3x4x2xf32, #tpu.memory_space<vmem>>, %arg4: memref<3x8x4xf32, #tpu.memory_space<vmem>>, %arg5: memref<384x256xbf16, #tpu.memory_space<vmem>>, %arg6: memref<256x128xbf16, #tpu.memory_space<vmem>>, %arg7: memref<128x128xbf16, #tpu.memory_space<vmem>>, %arg8: memref<1x8x128xf32, #tpu.memory_space<vmem>>) attributes {dimension_semantics = [#tpu.dimension_semantics<parallel>], iteration_bounds = array<i64: 2>, scalar_prefetch = 0 : i64, scratch_operands = 0 : i64, tpu.core_type = #tpu.core_type<tc>, window_params = [{transform_indices = @transform_0, window_bounds = array<i64: 1, 1, 384>}, {pipeline_mode = #tpu.pipeline_mode<synchronous>, transform_indices = @transform_1, window_bounds = array<i64: 3, 2, 1>}, {pipeline_mode = #tpu.pipeline_mode<synchronous>, transform_indices = @transform_2, window_bounds = array<i64: 3, 4, 2>}, {pipeline_mode = #tpu.pipeline_mode<synchronous>, transform_indices = @transform_3, window_bounds = array<i64: 3, 8, 4>}, {pipeline_mode = #tpu.pipeline_mode<synchronous>, transform_indices = @transform_4, window_bounds = array<i64: 384, 256>}, {pipeline_mode = #tpu.pipeline_mode<synchronous>, transform_indices = @transform_5, window_bounds = array<i64: 256, 128>}, {pipeline_mode = #tpu.pipeline_mode<synchronous>, transform_indices = @transform_6, window_bounds = array<i64: 128, 128>}, {transform_indices = @transform_7, window_bounds = array<i64: 1, 8, 128>}]} {
    %c0 = arith.constant 0 : index
    %c0_0 = arith.constant 0 : index
    %c0_1 = arith.constant 0 : index
    %0 = vector.load %arg1[%c0, %c0_0, %c0_1] : memref<1x1x384xf32, #tpu.memory_space<vmem>>, vector<1x1x384xf32>
    %1 = vector.shape_cast %0 : vector<1x1x384xf32> to vector<1x384xf32>
    %c0_2 = arith.constant 0 : index
    %c0_3 = arith.constant 0 : index
    %c0_4 = arith.constant 0 : index
    %2 = vector.load %arg2[%c0_2, %c0_3, %c0_4] : memref<3x2x1xf32, #tpu.memory_space<vmem>>, vector<1x2x1xf32>
    %3 = vector.shape_cast %2 : vector<1x2x1xf32> to vector<2x1xf32>
    %4 = vector.broadcast %3 : vector<2x1xf32> to vector<2x384xf32>
    %5 = vector.broadcast %1 : vector<1x384xf32> to vector<2x384xf32>
    %6 = arith.mulf %4, %5 : vector<2x384xf32>
    %c383_i32 = arith.constant 383 : i32
    %7 = tpu.dynamic_rotate %1 by %c383_i32 dim 1 : vector<1x384xf32>, i32 -> vector<1x384xf32>
    %c1 = arith.constant 1 : index
    %c0_5 = arith.constant 0 : index
    %c0_6 = arith.constant 0 : index
    %8 = vector.load %arg2[%c1, %c0_5, %c0_6] : memref<3x2x1xf32, #tpu.memory_space<vmem>>, vector<1x2x1xf32>
    %9 = vector.shape_cast %8 : vector<1x2x1xf32> to vector<2x1xf32>
    %10 = vector.broadcast %9 : vector<2x1xf32> to vector<2x384xf32>
    %11 = vector.broadcast %7 : vector<1x384xf32> to vector<2x384xf32>
    %12 = arith.mulf %10, %11 : vector<2x384xf32>
    %13 = arith.addf %6, %12 : vector<2x384xf32>
    %c382_i32 = arith.constant 382 : i32
    %14 = tpu.dynamic_rotate %1 by %c382_i32 dim 1 : vector<1x384xf32>, i32 -> vector<1x384xf32>
    %c2 = arith.constant 2 : index
    %c0_7 = arith.constant 0 : index
    %c0_8 = arith.constant 0 : index
    %15 = vector.load %arg2[%c2, %c0_7, %c0_8] : memref<3x2x1xf32, #tpu.memory_space<vmem>>, vector<1x2x1xf32>
    %16 = vector.shape_cast %15 : vector<1x2x1xf32> to vector<2x1xf32>
    %17 = vector.broadcast %16 : vector<2x1xf32> to vector<2x384xf32>
    %18 = vector.broadcast %14 : vector<1x384xf32> to vector<2x384xf32>
    %19 = arith.mulf %17, %18 : vector<2x384xf32>
    %20 = arith.addf %13, %19 : vector<2x384xf32>
    %cst = arith.constant 0.000000e+00 : f32
    %21 = vector.broadcast %cst : f32 to vector<2x384xf32>
    %22 = arith.maximumf %20, %21 : vector<2x384xf32>
    %23 = math.absf %20 : vector<2x384xf32>
    %cst_9 = arith.constant 0.000000e+00 : f32
    %24 = vector.broadcast %cst_9 : f32 to vector<2x384xf32>
    %25 = arith.subf %24, %23 : vector<2x384xf32>
    %26 = math.exp %25 : vector<2x384xf32>
    %cst_10 = arith.constant 1.000000e+00 : f32
    %27 = vector.broadcast %cst_10 : f32 to vector<2x384xf32>
    %28 = arith.addf %27, %26 : vector<2x384xf32>
    %29 = math.log %28 : vector<2x384xf32>
    %30 = arith.addf %22, %29 : vector<2x384xf32>
    %c383_i32_11 = arith.constant 383 : i32
    %31 = tpu.dynamic_rotate %30 by %c383_i32_11 dim 1 : vector<2x384xf32>, i32 -> vector<2x384xf32>
    %32 = arith.maximumf %30, %31 : vector<2x384xf32>
    %c0_12 = arith.constant 0 : index
    %c0_13 = arith.constant 0 : index
    %33 = vector.load %arg5[%c0_12, %c0_13] : memref<384x256xbf16, #tpu.memory_space<vmem>>, vector<384x256xbf16>
    %34 = arith.extf %33 : vector<384x256xbf16> to vector<384x256xf32>
    %cst_14 = arith.constant dense<0.000000e+00> : vector<2x256xf32>
    %35 = tpu.matmul %32, %34, %cst_14 {dimension_numbers = #tpu.dot_dimension_numbers<[1], [0], [0], [1], [0, 0, 1, 1], [], []>} : vector<2x384xf32>, vector<384x256xf32>, vector<2x256xf32> -> vector<2x256xf32>
    %c0_15 = arith.constant 0 : index
    %c0_16 = arith.constant 0 : index
    %c0_17 = arith.constant 0 : index
    %36 = vector.load %arg3[%c0_15, %c0_16, %c0_17] : memref<3x4x2xf32, #tpu.memory_space<vmem>>, vector<1x4x2xf32>
    %37 = vector.shape_cast %36 : vector<1x4x2xf32> to vector<4x2xf32>
    %cst_18 = arith.constant dense<0.000000e+00> : vector<4x256xf32>
    %38 = tpu.matmul %37, %35, %cst_18 {dimension_numbers = #tpu.dot_dimension_numbers<[1], [0], [0], [1], [0, 0, 1, 1], [], []>} : vector<4x2xf32>, vector<2x256xf32>, vector<4x256xf32> -> vector<4x256xf32>
    %c255_i32 = arith.constant 255 : i32
    %39 = tpu.dynamic_rotate %35 by %c255_i32 dim 1 : vector<2x256xf32>, i32 -> vector<2x256xf32>
    %c1_19 = arith.constant 1 : index
    %c0_20 = arith.constant 0 : index
    %c0_21 = arith.constant 0 : index
    %40 = vector.load %arg3[%c1_19, %c0_20, %c0_21] : memref<3x4x2xf32, #tpu.memory_space<vmem>>, vector<1x4x2xf32>
    %41 = vector.shape_cast %40 : vector<1x4x2xf32> to vector<4x2xf32>
    %cst_22 = arith.constant dense<0.000000e+00> : vector<4x256xf32>
    %42 = tpu.matmul %41, %39, %cst_22 {dimension_numbers = #tpu.dot_dimension_numbers<[1], [0], [0], [1], [0, 0, 1, 1], [], []>} : vector<4x2xf32>, vector<2x256xf32>, vector<4x256xf32> -> vector<4x256xf32>
    %43 = arith.addf %38, %42 : vector<4x256xf32>
    %c254_i32 = arith.constant 254 : i32
    %44 = tpu.dynamic_rotate %35 by %c254_i32 dim 1 : vector<2x256xf32>, i32 -> vector<2x256xf32>
    %c2_23 = arith.constant 2 : index
    %c0_24 = arith.constant 0 : index
    %c0_25 = arith.constant 0 : index
    %45 = vector.load %arg3[%c2_23, %c0_24, %c0_25] : memref<3x4x2xf32, #tpu.memory_space<vmem>>, vector<1x4x2xf32>
    %46 = vector.shape_cast %45 : vector<1x4x2xf32> to vector<4x2xf32>
    %cst_26 = arith.constant dense<0.000000e+00> : vector<4x256xf32>
    %47 = tpu.matmul %46, %44, %cst_26 {dimension_numbers = #tpu.dot_dimension_numbers<[1], [0], [0], [1], [0, 0, 1, 1], [], []>} : vector<4x2xf32>, vector<2x256xf32>, vector<4x256xf32> -> vector<4x256xf32>
    %48 = arith.addf %43, %47 : vector<4x256xf32>
    %cst_27 = arith.constant 0.000000e+00 : f32
    %49 = vector.broadcast %cst_27 : f32 to vector<4x256xf32>
    %50 = arith.maximumf %48, %49 : vector<4x256xf32>
    %51 = math.absf %48 : vector<4x256xf32>
    %cst_28 = arith.constant 0.000000e+00 : f32
    %52 = vector.broadcast %cst_28 : f32 to vector<4x256xf32>
    %53 = arith.subf %52, %51 : vector<4x256xf32>
    %54 = math.exp %53 : vector<4x256xf32>
    %cst_29 = arith.constant 1.000000e+00 : f32
    %55 = vector.broadcast %cst_29 : f32 to vector<4x256xf32>
    %56 = arith.addf %55, %54 : vector<4x256xf32>
    %57 = math.log %56 : vector<4x256xf32>
    %58 = arith.addf %50, %57 : vector<4x256xf32>
    %c255_i32_30 = arith.constant 255 : i32
    %59 = tpu.dynamic_rotate %58 by %c255_i32_30 dim 1 : vector<4x256xf32>, i32 -> vector<4x256xf32>
    %60 = arith.maximumf %58, %59 : vector<4x256xf32>
    %c0_31 = arith.constant 0 : index
    %c0_32 = arith.constant 0 : index
    %61 = vector.load %arg6[%c0_31, %c0_32] : memref<256x128xbf16, #tpu.memory_space<vmem>>, vector<256x128xbf16>
    %62 = arith.extf %61 : vector<256x128xbf16> to vector<256x128xf32>
    %cst_33 = arith.constant dense<0.000000e+00> : vector<4x128xf32>
    %63 = tpu.matmul %60, %62, %cst_33 {dimension_numbers = #tpu.dot_dimension_numbers<[1], [0], [0], [1], [0, 0, 1, 1], [], []>} : vector<4x256xf32>, vector<256x128xf32>, vector<4x128xf32> -> vector<4x128xf32>
    %c0_34 = arith.constant 0 : index
    %c0_35 = arith.constant 0 : index
    %c0_36 = arith.constant 0 : index
    %64 = vector.load %arg4[%c0_34, %c0_35, %c0_36] : memref<3x8x4xf32, #tpu.memory_space<vmem>>, vector<1x8x4xf32>
    %65 = vector.shape_cast %64 : vector<1x8x4xf32> to vector<8x4xf32>
    %cst_37 = arith.constant dense<0.000000e+00> : vector<8x128xf32>
    %66 = tpu.matmul %65, %63, %cst_37 {dimension_numbers = #tpu.dot_dimension_numbers<[1], [0], [0], [1], [0, 0, 1, 1], [], []>} : vector<8x4xf32>, vector<4x128xf32>, vector<8x128xf32> -> vector<8x128xf32>
    %c127_i32 = arith.constant 127 : i32
    %67 = tpu.dynamic_rotate %63 by %c127_i32 dim 1 : vector<4x128xf32>, i32 -> vector<4x128xf32>
    %c1_38 = arith.constant 1 : index
    %c0_39 = arith.constant 0 : index
    %c0_40 = arith.constant 0 : index
    %68 = vector.load %arg4[%c1_38, %c0_39, %c0_40] : memref<3x8x4xf32, #tpu.memory_space<vmem>>, vector<1x8x4xf32>
    %69 = vector.shape_cast %68 : vector<1x8x4xf32> to vector<8x4xf32>
    %cst_41 = arith.constant dense<0.000000e+00> : vector<8x128xf32>
    %70 = tpu.matmul %69, %67, %cst_41 {dimension_numbers = #tpu.dot_dimension_numbers<[1], [0], [0], [1], [0, 0, 1, 1], [], []>} : vector<8x4xf32>, vector<4x128xf32>, vector<8x128xf32> -> vector<8x128xf32>
    %71 = arith.addf %66, %70 : vector<8x128xf32>
    %c126_i32 = arith.constant 126 : i32
    %72 = tpu.dynamic_rotate %63 by %c126_i32 dim 1 : vector<4x128xf32>, i32 -> vector<4x128xf32>
    %c2_42 = arith.constant 2 : index
    %c0_43 = arith.constant 0 : index
    %c0_44 = arith.constant 0 : index
    %73 = vector.load %arg4[%c2_42, %c0_43, %c0_44] : memref<3x8x4xf32, #tpu.memory_space<vmem>>, vector<1x8x4xf32>
    %74 = vector.shape_cast %73 : vector<1x8x4xf32> to vector<8x4xf32>
    %cst_45 = arith.constant dense<0.000000e+00> : vector<8x128xf32>
    %75 = tpu.matmul %74, %72, %cst_45 {dimension_numbers = #tpu.dot_dimension_numbers<[1], [0], [0], [1], [0, 0, 1, 1], [], []>} : vector<8x4xf32>, vector<4x128xf32>, vector<8x128xf32> -> vector<8x128xf32>
    %76 = arith.addf %71, %75 : vector<8x128xf32>
    %cst_46 = arith.constant 0.000000e+00 : f32
    %77 = vector.broadcast %cst_46 : f32 to vector<8x128xf32>
    %78 = arith.maximumf %76, %77 : vector<8x128xf32>
    %79 = math.absf %76 : vector<8x128xf32>
    %cst_47 = arith.constant 0.000000e+00 : f32
    %80 = vector.broadcast %cst_47 : f32 to vector<8x128xf32>
    %81 = arith.subf %80, %79 : vector<8x128xf32>
    %82 = math.exp %81 : vector<8x128xf32>
    %cst_48 = arith.constant 1.000000e+00 : f32
    %83 = vector.broadcast %cst_48 : f32 to vector<8x128xf32>
    %84 = arith.addf %83, %82 : vector<8x128xf32>
    %85 = math.log %84 : vector<8x128xf32>
    %86 = arith.addf %78, %85 : vector<8x128xf32>
    %c127_i32_49 = arith.constant 127 : i32
    %87 = tpu.dynamic_rotate %86 by %c127_i32_49 dim 1 : vector<8x128xf32>, i32 -> vector<8x128xf32>
    %88 = arith.maximumf %86, %87 : vector<8x128xf32>
    %c0_50 = arith.constant 0 : index
    %c0_51 = arith.constant 0 : index
    %89 = vector.load %arg7[%c0_50, %c0_51] : memref<128x128xbf16, #tpu.memory_space<vmem>>, vector<128x128xbf16>
    %90 = arith.extf %89 : vector<128x128xbf16> to vector<128x128xf32>
    %cst_52 = arith.constant dense<0.000000e+00> : vector<8x128xf32>
    %91 = tpu.matmul %88, %90, %cst_52 {dimension_numbers = #tpu.dot_dimension_numbers<[1], [0], [0], [1], [0, 0, 1, 1], [], []>} : vector<8x128xf32>, vector<128x128xf32>, vector<8x128xf32> -> vector<8x128xf32>
    %c0_53 = arith.constant 0 : index
    %c0_54 = arith.constant 0 : index
    %c0_55 = arith.constant 0 : index
    %92 = vector.load %arg8[%c0_53, %c0_54, %c0_55] : memref<1x8x128xf32, #tpu.memory_space<vmem>>, vector<1x8x128xf32>
    %93 = vector.shape_cast %92 : vector<1x8x128xf32> to vector<8x128xf32>
    %94 = vector.shape_cast %91 : vector<8x128xf32> to vector<1x8x128xf32>
    tpu.vector_store %arg8[%c0_53, %c0_54, %c0_55], %94 {strides = array<i32>} : memref<1x8x128xf32, #tpu.memory_space<vmem>>, vector<1x8x128xf32>,
    return
  }
  func.func @transform_0(%arg0: i32) -> (i32, i32, i32) {
    %c0_i32 = arith.constant 0 : i32
    %c0_i32_0 = arith.constant 0 : i32
    %c0_i32_1 = arith.constant 0 : i32
    return %arg0, %c0_i32, %c0_i32_0 : i32, i32, i32
  }
  func.func @transform_1(%arg0: i32) -> (i32, i32, i32) {
    %c0_i32 = arith.constant 0 : i32
    %c0_i32_0 = arith.constant 0 : i32
    %c0_i32_1 = arith.constant 0 : i32
    %c0_i32_2 = arith.constant 0 : i32
    return %c0_i32, %c0_i32_0, %c0_i32_1 : i32, i32, i32
  }
  func.func @transform_2(%arg0: i32) -> (i32, i32, i32) {
    %c0_i32 = arith.constant 0 : i32
    %c0_i32_0 = arith.constant 0 : i32
    %c0_i32_1 = arith.constant 0 : i32
    %c0_i32_2 = arith.constant 0 : i32
    return %c0_i32, %c0_i32_0, %c0_i32_1 : i32, i32, i32
  }
  func.func @transform_3(%arg0: i32) -> (i32, i32, i32) {
    %c0_i32 = arith.constant 0 : i32
    %c0_i32_0 = arith.constant 0 : i32
    %c0_i32_1 = arith.constant 0 : i32
    %c0_i32_2 = arith.constant 0 : i32
    return %c0_i32, %c0_i32_0, %c0_i32_1 : i32, i32, i32
  }
  func.func @transform_4(%arg0: i32) -> (i32, i32) {
    %c0_i32 = arith.constant 0 : i32
    %c0_i32_0 = arith.constant 0 : i32
    %c0_i32_1 = arith.constant 0 : i32
    return %c0_i32, %c0_i32_0 : i32, i32
  }
  func.func @transform_5(%arg0: i32) -> (i32, i32) {
    %c0_i32 = arith.constant 0 : i32
    %c0_i32_0 = arith.constant 0 : i32
    %c0_i32_1 = arith.constant 0 : i32
    return %c0_i32, %c0_i32_0 : i32, i32
  }
  func.func @transform_6(%arg0: i32) -> (i32, i32) {
    %c0_i32 = arith.constant 0 : i32
    %c0_i32_0 = arith.constant 0 : i32
    %c0_i32_1 = arith.constant 0 : i32
    return %c0_i32, %c0_i32_0 : i32, i32
  }
  func.func @transform_7(%arg0: i32) -> (i32, i32, i32) {
    %c0_i32 = arith.constant 0 : i32
    %c0_i32_0 = arith.constant 0 : i32
    %c0_i32_1 = arith.constant 0 : i32
    return %arg0, %c0_i32, %c0_i32_0 : i32, i32, i32
  }
}

</mosaic_0001>

<llo_original>
// kernel: oned_stack_forward.1
$region0: #{oned_stack_forward.1}
  #allocation0 [shape = 'u32[]', space=smem, size = 0x4, offset = 0x4, fixed_abs, tag = 'smem constant byte address 0x4 - core index']
  #allocation1 [shape = 'u32[144,128]{1,0:T(1,128)}', space=vmem, size = 0x12000, scoped, tag = 'internal scratch']
  %s0 = inlined_call_operand.vmem [shape: f32[2,1,384], index: 0, kind: input, shape index: {}]
  %s1 = inlined_call_operand.vmem [shape: f32[3,2,1], index: 1, kind: input, shape index: {}]
  %s2 = inlined_call_operand.vmem [shape: f32[3,4,2], index: 2, kind: input, shape index: {}]
  %s3 = inlined_call_operand.vmem [shape: f32[3,8,4], index: 3, kind: input, shape index: {}]
  %s4 = inlined_call_operand.vmem [shape: bf16[384,256], index: 4, kind: input, shape index: {}]
  %s5 = inlined_call_operand.vmem [shape: bf16[256,128], index: 5, kind: input, shape index: {}]
  %s6 = inlined_call_operand.vmem [shape: bf16[128,128], index: 6, kind: input, shape index: {}]
  %s7 = inlined_call_operand.vmem [shape: f32[2,8,128], index: 7, kind: output, shape index: {}]
  %s8 = sld [smem:[#allocation0]]
  $region61: #{oned_stack_forward.1} parent=0
    _
  %s10 = ssub.s32 1, %s8
  %s11 = scalar_select 0, %s10, %s8
  loop: start=0, step=1, limit=4
  $region2: #{oned_stack_forward.1} parent=0 // loop_pre_header
    _
  $region3: #{oned_stack_forward.1} parent=0 // loop_header
    %s13 = sphi 0, %s17
    %p14 = scmp.ge.s32.totalorder %s13, 4
    %s23 = sphi 0, %s25
    %s26 = sphi 0, %s23
    %s27 = sphi 0, %s26
    %s43 = sphi 0, %s27
    %s47 = sphi 0, %s47
    %s49 = sphi 0, %s47
    %s50 = sphi 0, %s49
    %s64 = sphi 0, %s50
    %s68 = sphi 0, %s68
    %s70 = sphi 0, %s68
    %s71 = sphi 0, %s70
    %s85 = sphi 0, %s71
    %s89 = sphi 0, %s89
    %s91 = sphi 0, %s89
    %s92 = sphi 0, %s91
    %s106 = sphi 0, %s92
    %s110 = sphi 0, %s110
    %s112 = sphi 0, %s110
    %s113 = sphi 0, %s112
    %s127 = sphi 0, %s113
    %s131 = sphi 0, %s131
    %s133 = sphi 0, %s131
    %s134 = sphi 0, %s133
    %s148 = sphi 0, %s134
    %s152 = sphi 0, %s152
    %s154 = sphi 0, %s152
    %s155 = sphi 0, %s154
    %s169 = sphi 0, %s155
    %s175 = sphi 0, %s177
    %s178 = sphi 0, %s175
    %s179 = sphi 0, %s178
    %s195 = sphi 0, %s179
  $region4: #{oned_stack_forward.1} parent=0 // loop_header_branch
    %16 = sbr.rel (%p14) target = $region8
  $region5: #{oned_stack_forward.1} parent=0 // loop_body
    %s18 = ssub.s32 %s13, 1
    %s19 = ssub.s32 %s13, 2
    %s20 = sadd.s32 %s13, 1
    %s21 = ssub.s32 %s13, %s20
    %p22 = scmp.eq.s32.totalorder %s21, 0
    %s24 = sadd.s32 %s23, 1
    %s25 = scalar_select %p22, %s23, %s24
    %p28 = pneg %p22
    %p29 = scmp.eq.s32.totalorder %s13, 1
    %p30 = por %p28, %p29
    %p31 = scmp.ne.s32.totalorder %s23, %s26
    %p32 = scmp.eq.s32.totalorder %s13, 0
    %p33 = por %p31, %p32
    %p34 = scmp.ne.s32.totalorder %s23, %s26
    %p35 = scmp.eq.s32.totalorder %s18, 1
    %p36 = por %p34, %p35
    %p37 = scmp.ne.s32.totalorder %s26, %s27
    %p38 = scmp.eq.s32.totalorder %s18, 0
    %p39 = por %p37, %p38
    %p40 = scmp.ne.s32.totalorder %s26, %s27
    %p41 = scmp.eq.s32.totalorder %s19, 1
    %p42 = por %p40, %p41
    %p44 = scmp.ne.s32.totalorder %s27, %s43
    %p45 = scmp.eq.s32.totalorder %s19, 0
    %p46 = por %p44, %p45
    %s48 = sadd.s32 %s47, 1
    %p51 = scmp.eq.s32.totalorder %s13, 1
    %p52 = scmp.ne.s32.totalorder %s47, %s49
    %p53 = scmp.eq.s32.totalorder %s13, 0
    %p54 = por %p52, %p53
    %p55 = scmp.ne.s32.totalorder %s47, %s49
    %p56 = scmp.eq.s32.totalorder %s18, 1
    %p57 = por %p55, %p56
    %p58 = scmp.ne.s32.totalorder %s49, %s50
    %p59 = scmp.eq.s32.totalorder %s18, 0
    %p60 = por %p58, %p59
    %p61 = scmp.ne.s32.totalorder %s49, %s50
    %p62 = scmp.eq.s32.totalorder %s19, 1
    %p63 = por %p61, %p62
    %p65 = scmp.ne.s32.totalorder %s50, %s64
    %p66 = scmp.eq.s32.totalorder %s19, 0
    %p67 = por %p65, %p66
    %s69 = sadd.s32 %s68, 1
    %p72 = scmp.eq.s32.totalorder %s13, 1
    %p73 = scmp.ne.s32.totalorder %s68, %s70
    %p74 = scmp.eq.s32.totalorder %s13, 0
    %p75 = por %p73, %p74
    %p76 = scmp.ne.s32.totalorder %s68, %s70
    %p77 = scmp.eq.s32.totalorder %s18, 1
    %p78 = por %p76, %p77
    %p79 = scmp.ne.s32.totalorder %s70, %s71
    %p80 = scmp.eq.s32.totalorder %s18, 0
    %p81 = por %p79, %p80
    %p82 = scmp.ne.s32.totalorder %s70, %s71
    %p83 = scmp.eq.s32.totalorder %s19, 1
    %p84 = por %p82, %p83
    %p86 = scmp.ne.s32.totalorder %s71, %s85
    %p87 = scmp.eq.s32.totalorder %s19, 0
    %p88 = por %p86, %p87
    %s90 = sadd.s32 %s89, 1
    %p93 = scmp.eq.s32.totalorder %s13, 1
    %p94 = scmp.ne.s32.totalorder %s89, %s91
    %p95 = scmp.eq.s32.totalorder %s13, 0
    %p96 = por %p94, %p95
    %p97 = scmp.ne.s32.totalorder %s89, %s91
    %p98 = scmp.eq.s32.totalorder %s18, 1
    %p99 = por %p97, %p98
    %p100 = scmp.ne.s32.totalorder %s91, %s92
    %p101 = scmp.eq.s32.totalorder %s18, 0
    %p102 = por %p100, %p101
    %p103 = scmp.ne.s32.totalorder %s91, %s92
    %p104 = scmp.eq.s32.totalorder %s19, 1
    %p105 = por %p103, %p104
    %p107 = scmp.ne.s32.totalorder %s92, %s106
    %p108 = scmp.eq.s32.totalorder %s19, 0
    %p109 = por %p107, %p108
    %s111 = sadd.s32 %s110, 1
    %p114 = scmp.eq.s32.totalorder %s13, 1
    %p115 = scmp.ne.s32.totalorder %s110, %s112
    %p116 = scmp.eq.s32.totalorder %s13, 0
    %p117 = por %p115, %p116
    %p118 = scmp.ne.s32.totalorder %s110, %s112
    %p119 = scmp.eq.s32.totalorder %s18, 1
    %p120 = por %p118, %p119
    %p121 = scmp.ne.s32.totalorder %s112, %s113
    %p122 = scmp.eq.s32.totalorder %s18, 0
    %p123 = por %p121, %p122
    %p124 = scmp.ne.s32.totalorder %s112, %s113
    %p125 = scmp.eq.s32.totalorder %s19, 1
    %p126 = por %p124, %p125
    %p128 = scmp.ne.s32.totalorder %s113, %s127
    %p129 = scmp.eq.s32.totalorder %s19, 0
    %p130 = por %p128, %p129
    %s132 = sadd.s32 %s131, 1
    %p135 = scmp.eq.s32.totalorder %s13, 1
    %p136 = scmp.ne.s32.totalorder %s131, %s133
    %p137 = scmp.eq.s32.totalorder %s13, 0
    %p138 = por %p136, %p137
    %p139 = scmp.ne.s32.totalorder %s131, %s133
    %p140 = scmp.eq.s32.totalorder %s18, 1
    %p141 = por %p139, %p140
    %p142 = scmp.ne.s32.totalorder %s133, %s134
    %p143 = scmp.eq.s32.totalorder %s18, 0
    %p144 = por %p142, %p143
    %p145 = scmp.ne.s32.totalorder %s133, %s134
    %p146 = scmp.eq.s32.totalorder %s19, 1
    %p147 = por %p145, %p146
    %p149 = scmp.ne.s32.totalorder %s134, %s148
    %p150 = scmp.eq.s32.totalorder %s19, 0
    %p151 = por %p149, %p150
    %s153 = sadd.s32 %s152, 1
    %p156 = scmp.eq.s32.totalorder %s13, 1
    %p157 = scmp.ne.s32.totalorder %s152, %s154
    %p158 = scmp.eq.s32.totalorder %s13, 0
    %p159 = por %p157, %p158
    %p160 = scmp.ne.s32.totalorder %s152, %s154
    %p161 = scmp.eq.s32.totalorder %s18, 1
    %p162 = por %p160, %p161
    %p163 = scmp.ne.s32.totalorder %s154, %s155
    %p164 = scmp.eq.s32.totalorder %s18, 0
    %p165 = por %p163, %p164
    %p166 = scmp.ne.s32.totalorder %s154, %s155
    %p167 = scmp.eq.s32.totalorder %s19, 1
    %p168 = por %p166, %p167
    %p170 = scmp.ne.s32.totalorder %s155, %s169
    %p171 = scmp.eq.s32.totalorder %s19, 0
    %p172 = por %p170, %p171
    %s173 = ssub.s32 %s13, %s20
    %p174 = scmp.eq.s32.totalorder %s173, 0
    %s176 = sadd.s32 %s175, 1
    %s177 = scalar_select %p174, %s175, %s176
    %p180 = pneg %p174
    %p181 = scmp.eq.s32.totalorder %s13, 1
    %p182 = por %p180, %p181
    %p183 = scmp.ne.s32.totalorder %s175, %s178
    %p184 = scmp.eq.s32.totalorder %s13, 0
    %p185 = por %p183, %p184
    %p186 = scmp.ne.s32.totalorder %s175, %s178
    %p187 = scmp.eq.s32.totalorder %s18, 1
    %p188 = por %p186, %p187
    %p189 = scmp.ne.s32.totalorder %s178, %s179
    %p190 = scmp.eq.s32.totalorder %s18, 0
    %p191 = por %p189, %p190
    %p192 = scmp.ne.s32.totalorder %s178, %s179
    %p193 = scmp.eq.s32.totalorder %s19, 1
    %p194 = por %p192, %p193
    %p196 = scmp.ne.s32.totalorder %s179, %s195
    %p197 = scmp.eq.s32.totalorder %s19, 0
    %p198 = por %p196, %p197
    %p199 = scmp.le.s32.totalorder 1, %s13
    %p200 = scmp.lt.s32.totalorder %s13, 3
    %p201 = pnand %p199, %p200
    %p202 = pneg %p201
    // Predicated region
    $region9: #{oned_stack_forward.1} parent=5 // pred_check
      _
    $region10: #{oned_stack_forward.1} parent=5 // pred_check_branch
      %204 = sbr.rel (%p201) target = $region12
    $region11: #{oned_stack_forward.1} parent=5 // pred_region
      %s205 = ssub.s32 %s13, 1
      // Predicated region
      $region13: #{oned_stack_forward.1} parent=11 // pred_check
        %p206 = pneg %p60
      $region14: #{oned_stack_forward.1} parent=11 // pred_check_branch
        %208 = sbr.rel (%p206) target = $region16
      $region15: #{oned_stack_forward.1} parent=11 // pred_region
        _
      $region16: #{oned_stack_forward.1} parent=11 // pred_fallthru
        _
      // Predicated region
      $region17: #{oned_stack_forward.1} parent=11 // pred_check
        %p209 = pneg %p81
      $region18: #{oned_stack_forward.1} parent=11 // pred_check_branch
        %211 = sbr.rel (%p209) target = $region20
      $region19: #{oned_stack_forward.1} parent=11 // pred_region
        _
      $region20: #{oned_stack_forward.1} parent=11 // pred_fallthru
        _
      // Predicated region
      $region21: #{oned_stack_forward.1} parent=11 // pred_check
        %p212 = pneg %p102
      $region22: #{oned_stack_forward.1} parent=11 // pred_check_branch
        %214 = sbr.rel (%p212) target = $region24
      $region23: #{oned_stack_forward.1} parent=11 // pred_region
        _
      $region24: #{oned_stack_forward.1} parent=11 // pred_fallthru
        _
      // Predicated region
      $region25: #{oned_stack_forward.1} parent=11 // pred_check
        %p215 = pneg %p123
      $region26: #{oned_stack_forward.1} parent=11 // pred_check_branch
        %217 = sbr.rel (%p215) target = $region28
      $region27: #{oned_stack_forward.1} parent=11 // pred_region
        _
      $region28: #{oned_stack_forward.1} parent=11 // pred_fallthru
        _
      // Predicated region
      $region29: #{oned_stack_forward.1} parent=11 // pred_check
        %p218 = pneg %p144
      $region30: #{oned_stack_forward.1} parent=11 // pred_check_branch
        %220 = sbr.rel (%p218) target = $region32
      $region31: #{oned_stack_forward.1} parent=11 // pred_region
        _
      $region32: #{oned_stack_forward.1} parent=11 // pred_fallthru
        _
      // Predicated region
      $region33: #{oned_stack_forward.1} parent=11 // pred_check
        %p221 = pneg %p165
      $region34: #{oned_stack_forward.1} parent=11 // pred_check_branch
        %223 = sbr.rel (%p221) target = $region36
      $region35: #{oned_stack_forward.1} parent=11 // pred_region
        _
      $region36: #{oned_stack_forward.1} parent=11 // pred_fallthru
        _
    $region12: #{oned_stack_forward.1} parent=5 // pred_fallthru
      _
    %p224 = scmp.lt.s32.totalorder %s13, 2
    // Predicated region
    $region37: #{oned_stack_forward.1} parent=5 // pred_check
      %p225 = pneg %p224
    $region38: #{oned_stack_forward.1} parent=5 // pred_check_branch
      %227 = sbr.rel (%p225) target = $region40
    $region39: #{oned_stack_forward.1} parent=5 // pred_region
      // Predicated region
      $region41: #{oned_stack_forward.1} parent=39 // pred_check
        %p228 = pneg %p33
      $region42: #{oned_stack_forward.1} parent=39 // pred_check_branch
        %230 = sbr.rel (%p228) target = $region44
      $region43: #{oned_stack_forward.1} parent=39 // pred_region
        %p231 = scmp.lt.s32.totalorder %s13, 1
        %s232 = scalar_select %p231, %s13, 1
        %s233 = smul.addr %s232, 3
        %s234 = scalar_lea.vmem %s0, %s233
      $region44: #{oned_stack_forward.1} parent=39 // pred_fallthru
        _
    $region40: #{oned_stack_forward.1} parent=5 // pred_fallthru
      _
    %p235 = scmp.le.s32.totalorder 1, %s13
    %p236 = scmp.lt.s32.totalorder %s13, 3
    %p237 = pnand %p235, %p236
    %p238 = pneg %p237
    // Predicated region
    $region45: #{oned_stack_forward.1} parent=5 // pred_check
      _
    $region46: #{oned_stack_forward.1} parent=5 // pred_check_branch
      %240 = sbr.rel (%p237) target = $region48
    $region47: #{oned_stack_forward.1} parent=5 // pred_region
      %s241 = ssub.s32 %s13, 1
      %p242 = scmp.lt.s32.totalorder %s18, 1
      %s243 = scalar_select %p242, %s18, 1
      %s244 = smul.addr %s243, 3
      %s245 = scalar_lea.vmem %s0, %s244
      %p246 = pneg %p39
      %p247 = pneg %p36
      %p248 = pneg %p60
      %p249 = pneg %p57
      %p250 = pneg %p81
      %p251 = pneg %p78
      %p252 = pneg %p102
      %p253 = pneg %p99
      %p254 = pneg %p123
      %p255 = pneg %p120
      %p256 = pneg %p144
      %p257 = pneg %p141
      %p258 = pneg %p165
      %p259 = pneg %p162
      %p260 = pneg %p191
      %p261 = pneg %p188
      %p262 = scmp.lt.s32.totalorder %s18, 1
      %s263 = scalar_select %p262, %s18, 1
      %s264 = smul.addr %s263, 8
      %s265 = scalar_lea.vmem %s7, %s264
      %p266 = scmp.lt.s32.totalorder %s18, 1
      %s267 = scalar_select %p266, %s18, 1
      %s268 = smul.addr %s267, 3
      %s269 = scalar_lea.vmem %s0, %s268
      %p270 = scmp.lt.s32.totalorder %s18, 1
      %s271 = scalar_select %p270, %s18, 1
      %s272 = smul.addr %s271, 8
      %s273 = scalar_lea.vmem %s7, %s272
      %v274 = vld [vmem:[%s269] sm:$0x7]
      %v275 = vld [vmem:[%s1] sm:$0x3]
      %277 = vset.pattern.permute.xlu0 0
      %278 = vperm.xlu0 %277, %v275
      %v279 = vpop.permute.xlu0 %278
      %v282 = vlaneseq
      %v283 = vshrl.u32 %v282, 7
      %v284 = vsub.s32 0, %v283
      %v285 = vrot.slane %v274, %v284
      %v286 = vlaneseq
      %v287 = vshrl.u32 %v286, 7
      %v288 = vsub.s32 1, %v287
      %v289 = vrot.slane %v274, %v288
      %v290 = vlaneseq
      %v291 = vshrl.u32 %v290, 7
      %v292 = vsub.s32 2, %v291
      %v293 = vrot.slane %v274, %v292
      %v297 = vmul.f32 %v279, %v285
      %v298 = vmul.f32 %v279, %v289
      %v299 = vmul.f32 %v279, %v293
      %300 = vrot.lane.b32.xlu0 %v285, 127
      %v301 = vpop.permute.xlu0 %300
      %302 = vrot.lane.b32.xlu0 %v289, 127
      %v303 = vpop.permute.xlu0 %302
      %304 = vrot.lane.b32.xlu0 %v293, 127
      %v305 = vpop.permute.xlu0 %304
      %v306 = vlaneseq
      %v307 = vand.u32 %v306, 127
      %vm308 = vcmp.lt.s32.totalorder %v307, 127
      %v309 = vsel %vm308, %v303, %v305
      %v310 = vsel %vm308, %v301, %v303
      %v311 = vsel %vm308, %v305, %v301
      %s312 = scalar_lea.vmem %s1, 2
      %v313 = vld [vmem:[%s312] sm:$0x3]
      %315 = vset.pattern.permute.xlu0 0
      %316 = vperm.xlu0 %315, %v313
      %v317 = vpop.permute.xlu0 %316
      %v319 = vlaneseq
      %v320 = vshrl.u32 %v319, 7
      %v321 = vsub.s32 0, %v320
      %v322 = vrot.slane %v310, %v321
      %v323 = vlaneseq
      %v324 = vshrl.u32 %v323, 7
      %v325 = vsub.s32 0, %v324
      %v326 = vrot.slane %v309, %v325
      %v327 = vlaneseq
      %v328 = vshrl.u32 %v327, 7
      %v329 = vsub.s32 0, %v328
      %v330 = vrot.slane %v311, %v329
      %v331 = vmul.f32 %v317, %v322
      %v332 = vmul.f32 %v317, %v326
      %v333 = vmul.f32 %v317, %v330
      %v334 = vadd.f32 %v297, %v331
      %v335 = vadd.f32 %v298, %v332
      %v336 = vadd.f32 %v299, %v333
      %337 = vrot.lane.b32.xlu0 %v285, 126
      %v338 = vpop.permute.xlu0 %337
      %339 = vrot.lane.b32.xlu0 %v289, 126
      %v340 = vpop.permute.xlu0 %339
      %341 = vrot.lane.b32.xlu0 %v293, 126
      %v342 = vpop.permute.xlu0 %341
      %vm343 = vcmp.lt.s32.totalorder %v307, 126
      %v344 = vsel %vm343, %v340, %v342
      %v345 = vsel %vm343, %v338, %v340
      %v346 = vsel %vm343, %v342, %v338
      %s347 = scalar_lea.vmem %s1, 4
      %v348 = vld [vmem:[%s347] sm:$0x3]
      %350 = vset.pattern.permute.xlu0 0
      %351 = vperm.xlu0 %350, %v348
      %v352 = vpop.permute.xlu0 %351
      %v354 = vlaneseq
      %v355 = vshrl.u32 %v354, 7
      %v356 = vsub.s32 0, %v355
      %v357 = vrot.slane %v345, %v356
      %v358 = vlaneseq
      %v359 = vshrl.u32 %v358, 7
      %v360 = vsub.s32 0, %v359
      %v361 = vrot.slane %v344, %v360
      %v362 = vlaneseq
      %v363 = vshrl.u32 %v362, 7
      %v364 = vsub.s32 0, %v363
      %v365 = vrot.slane %v346, %v364
      %v366 = vmul.f32 %v352, %v357
      %v367 = vmul.f32 %v352, %v361
      %v368 = vmul.f32 %v352, %v365
      %v369 = vadd.f32 %v334, %v366
      %v370 = vadd.f32 %v335, %v367
      %v371 = vadd.f32 %v336, %v368
      %v372 = vmax.f32 %v369, 0.0
      %v373 = vmax.f32 %v370, 0.0
      %v374 = vmax.f32 %v371, 0.0
      %v375 = vand.u32 2147483647, %v369
      %v376 = vand.u32 2147483647, %v370
      %v377 = vand.u32 2147483647, %v371
      %v378 = vsub.f32 0.0, %v375
      %v379 = vsub.f32 0.0, %v376
      %v380 = vsub.f32 0.0, %v377
      %v381 = vmul.f32 %v378, 1.442695
      %v382 = vpow.pop %v381
      %v383 = vmul.f32 %v379, 1.442695
      %v384 = vpow.pop %v383
      %v385 = vmul.f32 %v380, 1.442695
      %v386 = vpow.pop %v385
      %v387 = vadd.f32 %v382, 1.0
      %v388 = vadd.f32 %v384, 1.0
      %v389 = vadd.f32 %v386, 1.0
      %v390 = vlog2.pop %v387
      %v391 = vmul.f32 %v390, 0.6931472
      %v392 = vlog2.pop %v388
      %v393 = vmul.f32 %v392, 0.6931472
      %v394 = vlog2.pop %v389
      %v395 = vmul.f32 %v394, 0.6931472
      %v396 = vadd.f32 %v372, %v391
      %v397 = vadd.f32 %v373, %v393
      %v398 = vadd.f32 %v374, %v395
      %399 = vrot.lane.b32.xlu0 %v396, 127
      %v400 = vpop.permute.xlu0 %399
      %401 = vrot.lane.b32.xlu0 %v397, 127
      %v402 = vpop.permute.xlu0 %401
      %403 = vrot.lane.b32.xlu0 %v398, 127
      %v404 = vpop.permute.xlu0 %403
      %v405 = vsel %vm308, %v402, %v404
      %v406 = vsel %vm308, %v400, %v402
      %v407 = vsel %vm308, %v404, %v400
      %v408 = vmax.f32 %v396, %v406
      %v409 = vmax.f32 %v397, %v405
      %v410 = vmax.f32 %v398, %v407
      %v411 = vld [vmem:[%s4] sm:$0xff]
      %v412 = vld [vmem:[%s4 + $0x8] sm:$0xff]
      %v413 = vld [vmem:[%s4 + $0x10] sm:$0xff]
      %v414 = vld [vmem:[%s4 + $0x18] sm:$0xff]
      %v415 = vld [vmem:[%s4 + $0x20] sm:$0xff]
      %v416 = vld [vmem:[%s4 + $0x28] sm:$0xff]
      %v417 = vld [vmem:[%s4 + $0x30] sm:$0xff]
      %v418 = vld [vmem:[%s4 + $0x38] sm:$0xff]
      %v419 = vld [vmem:[%s4 + $0x40] sm:$0xff]
      %v420 = vld [vmem:[%s4 + $0x48] sm:$0xff]
      %v421 = vld [vmem:[%s4 + $0x50] sm:$0xff]
      %v422 = vld [vmem:[%s4 + $0x58] sm:$0xff]
      %v423 = vld [vmem:[%s4 + $0x60] sm:$0xff]
      %v424 = vld [vmem:[%s4 + $0x68] sm:$0xff]
      %v425 = vld [vmem:[%s4 + $0x70] sm:$0xff]
      %v426 = vld [vmem:[%s4 + $0x78] sm:$0xff]
      %v427 = vld [vmem:[%s4 + $0x80] sm:$0xff]
      %v428 = vld [vmem:[%s4 + $0x88] sm:$0xff]
      %v429 = vld [vmem:[%s4 + $0x90] sm:$0xff]
      %v430 = vld [vmem:[%s4 + $0x98] sm:$0xff]
      %v431 = vld [vmem:[%s4 + $0xa0] sm:$0xff]
      %v432 = vld [vmem:[%s4 + $0xa8] sm:$0xff]
      %v433 = vld [vmem:[%s4 + $0xb0] sm:$0xff]
      %v434 = vld [vmem:[%s4 + $0xb8] sm:$0xff]
      %v435 = vld [vmem:[%s4 + $0xc0] sm:$0xff]
      %v436 = vld [vmem:[%s4 + $0xc8] sm:$0xff]
      %v437 = vld [vmem:[%s4 + $0xd0] sm:$0xff]
      %v438 = vld [vmem:[%s4 + $0xd8] sm:$0xff]
      %v439 = vld [vmem:[%s4 + $0xe0] sm:$0xff]
      %v440 = vld [vmem:[%s4 + $0xe8] sm:$0xff]
      %v441 = vld [vmem:[%s4 + $0xf0] sm:$0xff]
      %v442 = vld [vmem:[%s4 + $0xf8] sm:$0xff]
      %v443 = vld [vmem:[%s4 + $0x100] sm:$0xff]
      %v444 = vld [vmem:[%s4 + $0x108] sm:$0xff]
      %v445 = vld [vmem:[%s4 + $0x110] sm:$0xff]
      %v446 = vld [vmem:[%s4 + $0x118] sm:$0xff]
      %v447 = vld [vmem:[%s4 + $0x120] sm:$0xff]
      %v448 = vld [vmem:[%s4 + $0x128] sm:$0xff]
      %v449 = vld [vmem:[%s4 + $0x130] sm:$0xff]
      %v450 = vld [vmem:[%s4 + $0x138] sm:$0xff]
      %v451 = vld [vmem:[%s4 + $0x140] sm:$0xff]
      %v452 = vld [vmem:[%s4 + $0x148] sm:$0xff]
      %v453 = vld [vmem:[%s4 + $0x150] sm:$0xff]
      %v454 = vld [vmem:[%s4 + $0x158] sm:$0xff]
      %v455 = vld [vmem:[%s4 + $0x160] sm:$0xff]
      %v456 = vld [vmem:[%s4 + $0x168] sm:$0xff]
      %v457 = vld [vmem:[%s4 + $0x170] sm:$0xff]
      %v458 = vld [vmem:[%s4 + $0x178] sm:$0xff]
      %v459 = vunpack.c.l.bf16 %v411
      %v460 = vunpack.c.h.bf16 %v411
      %v461 = vunpack.c.l.bf16 %v412
      %v462 = vunpack.c.h.bf16 %v412
      %v463 = vunpack.c.l.bf16 %v413
      %v464 = vunpack.c.h.bf16 %v413
      %v465 = vunpack.c.l.bf16 %v414
      %v466 = vunpack.c.h.bf16 %v414
      %v467 = vunpack.c.l.bf16 %v415
      %v468 = vunpack.c.h.bf16 %v415
      %v469 = vunpack.c.l.bf16 %v416
      %v470 = vunpack.c.h.bf16 %v416
      %v471 = vunpack.c.l.bf16 %v417
      %v472 = vunpack.c.h.bf16 %v417
      %v473 = vunpack.c.l.bf16 %v418
      %v474 = vunpack.c.h.bf16 %v418
      %v475 = vunpack.c.l.bf16 %v419
      %v476 = vunpack.c.h.bf16 %v419
      %v477 = vunpack.c.l.bf16 %v420
      %v478 = vunpack.c.h.bf16 %v420
      %v479 = vunpack.c.l.bf16 %v421
      %v480 = vunpack.c.h.bf16 %v421
      %v481 = vunpack.c.l.bf16 %v422
      %v482 = vunpack.c.h.bf16 %v422
      %v483 = vunpack.c.l.bf16 %v423
      %v484 = vunpack.c.h.bf16 %v423
      %v485 = vunpack.c.l.bf16 %v424
      %v486 = vunpack.c.h.bf16 %v424
      %v487 = vunpack.c.l.bf16 %v425
      %v488 = vunpack.c.h.bf16 %v425
      %v489 = vunpack.c.l.bf16 %v426
      %v490 = vunpack.c.h.bf16 %v426
      %v491 = vunpack.c.l.bf16 %v427
      %v492 = vunpack.c.h.bf16 %v427
      %v493 = vunpack.c.l.bf16 %v428
      %v494 = vunpack.c.h.bf16 %v428
      %v495 = vunpack.c.l.bf16 %v429
      %v496 = vunpack.c.h.bf16 %v429
      %v497 = vunpack.c.l.bf16 %v430
      %v498 = vunpack.c.h.bf16 %v430
      %v499 = vunpack.c.l.bf16 %v431
      %v500 = vunpack.c.h.bf16 %v431
      %v501 = vunpack.c.l.bf16 %v432
      %v502 = vunpack.c.h.bf16 %v432
      %v503 = vunpack.c.l.bf16 %v433
      %v504 = vunpack.c.h.bf16 %v433
      %v505 = vunpack.c.l.bf16 %v434
      %v506 = vunpack.c.h.bf16 %v434
      %v507 = vunpack.c.l.bf16 %v435
      %v508 = vunpack.c.h.bf16 %v435
      %v509 = vunpack.c.l.bf16 %v436
      %v510 = vunpack.c.h.bf16 %v436
      %v511 = vunpack.c.l.bf16 %v437
      %v512 = vunpack.c.h.bf16 %v437
      %v513 = vunpack.c.l.bf16 %v438
      %v514 = vunpack.c.h.bf16 %v438
      %v515 = vunpack.c.l.bf16 %v439
      %v516 = vunpack.c.h.bf16 %v439
      %v517 = vunpack.c.l.bf16 %v440
      %v518 = vunpack.c.h.bf16 %v440
      %v519 = vunpack.c.l.bf16 %v441
      %v520 = vunpack.c.h.bf16 %v441
      %v521 = vunpack.c.l.bf16 %v442
      %v522 = vunpack.c.h.bf16 %v442
      %v523 = vunpack.c.l.bf16 %v443
      %v524 = vunpack.c.h.bf16 %v443
      %v525 = vunpack.c.l.bf16 %v444
      %v526 = vunpack.c.h.bf16 %v444
      %v527 = vunpack.c.l.bf16 %v445
      %v528 = vunpack.c.h.bf16 %v445
      %v529 = vunpack.c.l.bf16 %v446
      %v530 = vunpack.c.h.bf16 %v446
      %v531 = vunpack.c.l.bf16 %v447
      %v532 = vunpack.c.h.bf16 %v447
      %v533 = vunpack.c.l.bf16 %v448
      %v534 = vunpack.c.h.bf16 %v448
      %v535 = vunpack.c.l.bf16 %v449
      %v536 = vunpack.c.h.bf16 %v449
      %v537 = vunpack.c.l.bf16 %v450
      %v538 = vunpack.c.h.bf16 %v450
      %v539 = vunpack.c.l.bf16 %v451
      %v540 = vunpack.c.h.bf16 %v451
      %v541 = vunpack.c.l.bf16 %v452
      %v542 = vunpack.c.h.bf16 %v452
      %v543 = vunpack.c.l.bf16 %v453
      %v544 = vunpack.c.h.bf16 %v453
      %v545 = vunpack.c.l.bf16 %v454
      %v546 = vunpack.c.h.bf16 %v454
      %v547 = vunpack.c.l.bf16 %v455
      %v548 = vunpack.c.h.bf16 %v455
      %v549 = vunpack.c.l.bf16 %v456
      %v550 = vunpack.c.h.bf16 %v456
      %v551 = vunpack.c.l.bf16 %v457
      %v552 = vunpack.c.h.bf16 %v457
      %v553 = vunpack.c.l.bf16 %v458
      %v554 = vunpack.c.h.bf16 %v458
      %555 = vmatprep.subr.mxu0 %v460
      %556 = vmatpush1.msra.mxu0 %v459
      %557 = vmatprep.subr.mxu0 %v462
      %558 = vmatpush1.msra.mxu0 %v461
      %559 = vmatprep.subr.mxu0 %v464
      %560 = vmatpush1.msra.mxu0 %v463
      %561 = vmatprep.subr.mxu0 %v466
      %562 = vmatpush1.msra.mxu0 %v465
      %563 = vmatprep.subr.mxu0 %v468
      %564 = vmatpush1.msra.mxu0 %v467
      %565 = vmatprep.subr.mxu0 %v470
      %566 = vmatpush1.msra.mxu0 %v469
      %567 = vmatprep.subr.mxu0 %v472
      %568 = vmatpush1.msra.mxu0 %v471
      %569 = vmatprep.subr.mxu0 %v474
      %570 = vmatpush1.msra.mxu0 %v473
      %571 = vmatprep.subr.mxu0 %v476
      %572 = vmatpush1.msra.mxu0 %v475
      %573 = vmatprep.subr.mxu0 %v478
      %574 = vmatpush1.msra.mxu0 %v477
      %575 = vmatprep.subr.mxu0 %v480
      %576 = vmatpush1.msra.mxu0 %v479
      %577 = vmatprep.subr.mxu0 %v482
      %578 = vmatpush1.msra.mxu0 %v481
      %579 = vmatprep.subr.mxu0 %v484
      %580 = vmatpush1.msra.mxu0 %v483
      %581 = vmatprep.subr.mxu0 %v486
      %582 = vmatpush1.msra.mxu0 %v485
      %583 = vmatprep.subr.mxu0 %v488
      %584 = vmatpush1.msra.mxu0 %v487
      %585 = vmatprep.subr.mxu0 %v490
      %586 = vmatpush1.msra.mxu0 %v489
      %587 = vmatprep.subr.mxu0 %v492
      %588 = vmatpush1.msra.mxu0 %v491
      %589 = vmatprep.subr.mxu0 %v494
      %590 = vmatpush1.msra.mxu0 %v493
      %591 = vmatprep.subr.mxu0 %v496
      %592 = vmatpush1.msra.mxu0 %v495
      %593 = vmatprep.subr.mxu0 %v498
      %594 = vmatpush1.msra.mxu0 %v497
      %595 = vmatprep.subr.mxu0 %v500
      %596 = vmatpush1.msra.mxu0 %v499
      %597 = vmatprep.subr.mxu0 %v502
      %598 = vmatpush1.msra.mxu0 %v501
      %599 = vmatprep.subr.mxu0 %v504
      %600 = vmatpush1.msra.mxu0 %v503
      %601 = vmatprep.subr.mxu0 %v506
      %602 = vmatpush1.msra.mxu0 %v505
      %603 = vmatprep.subr.mxu0 %v508
      %604 = vmatpush1.msra.mxu0 %v507
      %605 = vmatprep.subr.mxu0 %v510
      %606 = vmatpush1.msra.mxu0 %v509
      %607 = vmatprep.subr.mxu0 %v512
      %608 = vmatpush1.msra.mxu0 %v511
      %609 = vmatprep.subr.mxu0 %v514
      %610 = vmatpush1.msra.mxu0 %v513
      %611 = vmatprep.subr.mxu0 %v516
      %612 = vmatpush1.msra.mxu0 %v515
      %613 = vmatprep.subr.mxu0 %v518
      %614 = vmatpush1.msra.mxu0 %v517
      %615 = vmatprep.subr.mxu0 %v520
      %616 = vmatpush1.msra.mxu0 %v519
      %617 = vmatprep.subr.mxu0 %v522
      %618 = vmatpush1.msra.mxu0 %v521
      %619 = vmatprep.mubr.f32.mxu0 %v409
      %620 = vmatmul.mubr.f32.gmra.mrb[0].mxu0 %v408
      %v621 = vpop.f32.mrb[0].mxu0
      %v622 = vadd.f32 0.0, %v621
      %v623 = vpop.f32.mrb[0].mxu0
      %v624 = vadd.f32 0.0, %v623
      %625 = vdwg.mxu0
      %626 = vmatprep.subr.mxu0 %v524
      %627 = vmatpush1.msra.mxu0 %v523
      %628 = vmatprep.subr.mxu0 %v526
      %629 = vmatpush1.msra.mxu0 %v525
      %630 = vmatprep.subr.mxu0 %v528
      %631 = vmatpush1.msra.mxu0 %v527
      %632 = vmatprep.subr.mxu0 %v530
      %633 = vmatpush1.msra.mxu0 %v529
      %634 = vmatprep.subr.mxu0 %v532
      %635 = vmatpush1.msra.mxu0 %v531
      %636 = vmatprep.subr.mxu0 %v534
      %637 = vmatpush1.msra.mxu0 %v533
      %638 = vmatprep.subr.mxu0 %v536
      %639 = vmatpush1.msra.mxu0 %v535
      %640 = vmatprep.subr.mxu0 %v538
      %641 = vmatpush1.msra.mxu0 %v537
      %642 = vmatprep.subr.mxu0 %v540
      %643 = vmatpush1.msra.mxu0 %v539
      %644 = vmatprep.subr.mxu0 %v542
      %645 = vmatpush1.msra.mxu0 %v541
      %646 = vmatprep.subr.mxu0 %v544
      %647 = vmatpush1.msra.mxu0 %v543
      %648 = vmatprep.subr.mxu0 %v546
      %649 = vmatpush1.msra.mxu0 %v545
      %650 = vmatprep.subr.mxu0 %v548
      %651 = vmatpush1.msra.mxu0 %v547
      %652 = vmatprep.subr.mxu0 %v550
      %653 = vmatpush1.msra.mxu0 %v549
      %654 = vmatprep.subr.mxu0 %v552
      %655 = vmatpush1.msra.mxu0 %v551
      %656 = vmatprep.subr.mxu0 %v554
      %657 = vmatpush1.msra.mxu0 %v553
      %658 = vmatprep.subr.mxu0 0.0
      %659 = vmatpush1.msra.mxu0 0.0
      %660 = vmatprep.subr.mxu0 0.0
      %661 = vmatpush1.msra.mxu0 0.0
      %662 = vmatprep.subr.mxu0 0.0
      %663 = vmatpush1.msra.mxu0 0.0
      %664 = vmatprep.subr.mxu0 0.0
      %665 = vmatpush1.msra.mxu0 0.0
      %666 = vmatprep.subr.mxu0 0.0
      %667 = vmatpush1.msra.mxu0 0.0
      %668 = vmatprep.subr.mxu0 0.0
      %669 = vmatpush1.msra.mxu0 0.0
      %670 = vmatprep.subr.mxu0 0.0
      %671 = vmatpush1.msra.mxu0 0.0
      %672 = vmatprep.subr.mxu0 0.0
      %673 = vmatpush1.msra.mxu0 0.0
      %674 = vmatprep.subr.mxu0 0.0
      %675 = vmatpush1.msra.mxu0 0.0
      %676 = vmatprep.subr.mxu0 0.0
      %677 = vmatpush1.msra.mxu0 0.0
      %678 = vmatprep.subr.mxu0 0.0
      %679 = vmatpush1.msra.mxu0 0.0
      %680 = vmatprep.subr.mxu0 0.0
      %681 = vmatpush1.msra.mxu0 0.0
      %682 = vmatprep.subr.mxu0 0.0
      %683 = vmatpush1.msra.mxu0 0.0
      %684 = vmatprep.subr.mxu0 0.0
      %685 = vmatpush1.msra.mxu0 0.0
      %686 = vmatprep.subr.mxu0 0.0
      %687 = vmatpush1.msra.mxu0 0.0
      %688 = vmatprep.subr.mxu0 0.0
      %689 = vmatpush1.msra.mxu0 0.0
      %690 = vmatprep.mubr.f32.mxu0 0.0
      %691 = vmatmul.mubr.f32.gmra.mrb[0].mxu0 %v410
      %v692 = vpop.f32.mrb[0].mxu0
      %v693 = vadd.f32 %v622, %v692
      %v694 = vpop.f32.mrb[0].mxu0
      %v695 = vadd.f32 %v624, %v694
      %696 = vdwg.mxu0
      %v697 = vld [vmem:[%s2] sm:$0xf]
      %698 = vrot.lane.b32.xlu0 %v693, 127
      %v699 = vpop.permute.xlu0 %698
      %700 = vrot.lane.b32.xlu0 %v695, 127
      %v701 = vpop.permute.xlu0 %700
      %v702 = vsel %vm308, %v699, %v701
      %v703 = vsel %vm308, %v701, %v699
      %s704 = scalar_lea.vmem %s2, 4
      %v705 = vld [vmem:[%s704] sm:$0xf]
      %vm706 = vcmask 15360
      %v708 = vsel %vm706, %v705, 0
      %vm710 = vcmask 1041408
      %v712 = vsel %vm710, %v702, 0
      %v715 = vsel %vm710, %v703, 0
      %717 = vmatprep.subr.mxu0 %v715
      %718 = vmatpush1.msra.mxu0 %v712
      %719 = vmatprep.subr.mxu0 0.0
      %720 = vmatpush1.msra.mxu0 0.0
      %721 = vmatprep.subr.mxu0 0.0
      %722 = vmatpush1.msra.mxu0 0.0
      %723 = vmatprep.subr.mxu0 0.0
      %724 = vmatpush1.msra.mxu0 0.0
      %725 = vmatprep.subr.mxu0 0.0
      %726 = vmatpush1.msra.mxu0 0.0
      %727 = vmatprep.subr.mxu0 0.0
      %728 = vmatpush1.msra.mxu0 0.0
      %729 = vmatprep.subr.mxu0 0.0
      %730 = vmatpush1.msra.mxu0 0.0
      %731 = vmatprep.subr.mxu0 0.0
      %732 = vmatpush1.msra.mxu0 0.0
      %733 = vmatprep.subr.mxu0 0.0
      %734 = vmatpush1.msra.mxu0 0.0
      %735 = vmatprep.subr.mxu0 0.0
      %736 = vmatpush1.msra.mxu0 0.0
      %737 = vmatprep.subr.mxu0 0.0
      %738 = vmatpush1.msra.mxu0 0.0
      %739 = vmatprep.subr.mxu0 0.0
      %740 = vmatpush1.msra.mxu0 0.0
      %741 = vmatprep.subr.mxu0 0.0
      %742 = vmatpush1.msra.mxu0 0.0
      %743 = vmatprep.subr.mxu0 0.0
      %744 = vmatpush1.msra.mxu0 0.0
      %745 = vmatprep.subr.mxu0 0.0
      %746 = vmatpush1.msra.mxu0 0.0
      %747 = vmatprep.subr.mxu0 0.0
      %748 = vmatpush1.msra.mxu0 0.0
      %749 = vmatprep.subr.mxu0 0.0
      %750 = vmatpush1.msra.mxu0 0.0
      %751 = vmatprep.subr.mxu0 0.0
      %752 = vmatpush1.msra.mxu0 0.0
      %753 = vmatprep.subr.mxu0 0.0
      %754 = vmatpush1.msra.mxu0 0.0
      %755 = vmatprep.subr.mxu0 0.0
      %756 = vmatpush1.msra.mxu0 0.0
      %757 = vmatprep.subr.mxu0 0.0
      %758 = vmatpush1.msra.mxu0 0.0
      %759 = vmatprep.subr.mxu0 0.0
      %760 = vmatpush1.msra.mxu0 0.0
      %761 = vmatprep.subr.mxu0 0.0
      %762 = vmatpush1.msra.mxu0 0.0
      %763 = vmatprep.subr.mxu0 0.0
      %764 = vmatpush1.msra.mxu0 0.0
      %765 = vmatprep.subr.mxu0 0.0
      %766 = vmatpush1.msra.mxu0 0.0
      %767 = vmatprep.subr.mxu0 0.0
      %768 = vmatpush1.msra.mxu0 0.0
      %769 = vmatprep.subr.mxu0 0.0
      %770 = vmatpush1.msra.mxu0 0.0
      %771 = vmatprep.subr.mxu0 0.0
      %772 = vmatpush1.msra.mxu0 0.0
      %773 = vmatprep.subr.mxu0 0.0
      %774 = vmatpush1.msra.mxu0 0.0
      %775 = vmatprep.subr.mxu0 0.0
      %776 = vmatpush1.msra.mxu0 0.0
      %777 = vmatprep.subr.mxu0 0.0
      %778 = vmatpush1.msra.mxu0 0.0
      %779 = vmatprep.subr.mxu0 0.0
      %780 = vmatpush1.msra.mxu0 0.0
      %781 = vmatprep.mubr.f32.mxu0 0.0
      %782 = vmatmul.mubr.f32.gmra.mrb[0].mxu0 %v708
      %v783 = vpop.f32.mrb[0].mxu0
      %v784 = vadd.f32 0.0, %v783
      %v785 = vpop.f32.mrb[0].mxu0
      %v786 = vadd.f32 0.0, %v785
      %787 = vdwg.mxu0
      %v789 = vsel %vm706, %v697, 0
      %v792 = vsel %vm710, %v693, 0
      %v795 = vsel %vm710, %v695, 0
      %797 = vmatprep.subr.mxu0 %v795
      %798 = vmatpush1.msra.mxu0 %v792
      %799 = vmatprep.subr.mxu0 0.0
      %800 = vmatpush1.msra.mxu0 0.0
      %801 = vmatprep.subr.mxu0 0.0
      %802 = vmatpush1.msra.mxu0 0.0
      %803 = vmatprep.subr.mxu0 0.0
      %804 = vmatpush1.msra.mxu0 0.0
      %805 = vmatprep.subr.mxu0 0.0
      %806 = vmatpush1.msra.mxu0 0.0
      %807 = vmatprep.subr.mxu0 0.0
      %808 = vmatpush1.msra.mxu0 0.0
      %809 = vmatprep.subr.mxu0 0.0
      %810 = vmatpush1.msra.mxu0 0.0
      %811 = vmatprep.subr.mxu0 0.0
      %812 = vmatpush1.msra.mxu0 0.0
      %813 = vmatprep.subr.mxu0 0.0
      %814 = vmatpush1.msra.mxu0 0.0
      %815 = vmatprep.subr.mxu0 0.0
      %816 = vmatpush1.msra.mxu0 0.0
      %817 = vmatprep.subr.mxu0 0.0
      %818 = vmatpush1.msra.mxu0 0.0
      %819 = vmatprep.subr.mxu0 0.0
      %820 = vmatpush1.msra.mxu0 0.0
      %821 = vmatprep.subr.mxu0 0.0
      %822 = vmatpush1.msra.mxu0 0.0
      %823 = vmatprep.subr.mxu0 0.0
      %824 = vmatpush1.msra.mxu0 0.0
      %825 = vmatprep.subr.mxu0 0.0
      %826 = vmatpush1.msra.mxu0 0.0
      %827 = vmatprep.subr.mxu0 0.0
      %828 = vmatpush1.msra.mxu0 0.0
      %829 = vmatprep.subr.mxu0 0.0
      %830 = vmatpush1.msra.mxu0 0.0
      %831 = vmatprep.subr.mxu0 0.0
      %832 = vmatpush1.msra.mxu0 0.0
      %833 = vmatprep.subr.mxu0 0.0
      %834 = vmatpush1.msra.mxu0 0.0
      %835 = vmatprep.subr.mxu0 0.0
      %836 = vmatpush1.msra.mxu0 0.0
      %837 = vmatprep.subr.mxu0 0.0
      %838 = vmatpush1.msra.mxu0 0.0
      %839 = vmatprep.subr.mxu0 0.0
      %840 = vmatpush1.msra.mxu0 0.0
      %841 = vmatprep.subr.mxu0 0.0
      %842 = vmatpush1.msra.mxu0 0.0
      %843 = vmatprep.subr.mxu0 0.0
      %844 = vmatpush1.msra.mxu0 0.0
      %845 = vmatprep.subr.mxu0 0.0
      %846 = vmatpush1.msra.mxu0 0.0
      %847 = vmatprep.subr.mxu0 0.0
      %848 = vmatpush1.msra.mxu0 0.0
      %849 = vmatprep.subr.mxu0 0.0
      %850 = vmatpush1.msra.mxu0 0.0
      %851 = vmatprep.subr.mxu0 0.0
      %852 = vmatpush1.msra.mxu0 0.0
      %853 = vmatprep.subr.mxu0 0.0
      %854 = vmatpush1.msra.mxu0 0.0
      %855 = vmatprep.subr.mxu0 0.0
      %856 = vmatpush1.msra.mxu0 0.0
      %857 = vmatprep.subr.mxu0 0.0
      %858 = vmatpush1.msra.mxu0 0.0
      %859 = vmatprep.subr.mxu0 0.0
      %860 = vmatpush1.msra.mxu0 0.0
      %861 = vmatprep.mubr.f32.mxu0 0.0
      %862 = vmatmul.mubr.f32.gmra.mrb[0].mxu0 %v789
      %v863 = vpop.f32.mrb[0].mxu0
      %v864 = vadd.f32 %v784, %v863
      %v865 = vpop.f32.mrb[0].mxu0
      %v866 = vadd.f32 %v786, %v865
      %867 = vdwg.mxu0
      %868 = vrot.lane.b32.xlu0 %v693, 126
      %v869 = vpop.permute.xlu0 %868
      %870 = vrot.lane.b32.xlu0 %v695, 126
      %v871 = vpop.permute.xlu0 %870
      %v872 = vsel %vm343, %v869, %v871
      %v873 = vsel %vm343, %v871, %v869
      %s874 = scalar_lea.vmem %s2, 8
      %v875 = vld [vmem:[%s874] sm:$0xf]
      %v877 = vsel %vm706, %v875, 0
      %v880 = vsel %vm710, %v872, 0
      %v883 = vsel %vm710, %v873, 0
      %885 = vmatprep.subr.mxu0 %v883
      %886 = vmatpush1.msra.mxu0 %v880
      %887 = vmatprep.subr.mxu0 0.0
      %888 = vmatpush1.msra.mxu0 0.0
      %889 = vmatprep.subr.mxu0 0.0
      %890 = vmatpush1.msra.mxu0 0.0
      %891 = vmatprep.subr.mxu0 0.0
      %892 = vmatpush1.msra.mxu0 0.0
      %893 = vmatprep.subr.mxu0 0.0
      %894 = vmatpush1.msra.mxu0 0.0
      %895 = vmatprep.subr.mxu0 0.0
      %896 = vmatpush1.msra.mxu0 0.0
      %897 = vmatprep.subr.mxu0 0.0
      %898 = vmatpush1.msra.mxu0 0.0
      %899 = vmatprep.subr.mxu0 0.0
      %900 = vmatpush1.msra.mxu0 0.0
      %901 = vmatprep.subr.mxu0 0.0
      %902 = vmatpush1.msra.mxu0 0.0
      %903 = vmatprep.subr.mxu0 0.0
      %904 = vmatpush1.msra.mxu0 0.0
      %905 = vmatprep.subr.mxu0 0.0
      %906 = vmatpush1.msra.mxu0 0.0
      %907 = vmatprep.subr.mxu0 0.0
      %908 = vmatpush1.msra.mxu0 0.0
      %909 = vmatprep.subr.mxu0 0.0
      %910 = vmatpush1.msra.mxu0 0.0
      %911 = vmatprep.subr.mxu0 0.0
      %912 = vmatpush1.msra.mxu0 0.0
      %913 = vmatprep.subr.mxu0 0.0
      %914 = vmatpush1.msra.mxu0 0.0
      %915 = vmatprep.subr.mxu0 0.0
      %916 = vmatpush1.msra.mxu0 0.0
      %917 = vmatprep.subr.mxu0 0.0
      %918 = vmatpush1.msra.mxu0 0.0
      %919 = vmatprep.subr.mxu0 0.0
      %920 = vmatpush1.msra.mxu0 0.0
      %921 = vmatprep.subr.mxu0 0.0
      %922 = vmatpush1.msra.mxu0 0.0
      %923 = vmatprep.subr.mxu0 0.0
      %924 = vmatpush1.msra.mxu0 0.0
      %925 = vmatprep.subr.mxu0 0.0
      %926 = vmatpush1.msra.mxu0 0.0
      %927 = vmatprep.subr.mxu0 0.0
      %928 = vmatpush1.msra.mxu0 0.0
      %929 = vmatprep.subr.mxu0 0.0
      %930 = vmatpush1.msra.mxu0 0.0
      %931 = vmatprep.subr.mxu0 0.0
      %932 = vmatpush1.msra.mxu0 0.0
      %933 = vmatprep.subr.mxu0 0.0
      %934 = vmatpush1.msra.mxu0 0.0
      %935 = vmatprep.subr.mxu0 0.0
      %936 = vmatpush1.msra.mxu0 0.0
      %937 = vmatprep.subr.mxu0 0.0
      %938 = vmatpush1.msra.mxu0 0.0
      %939 = vmatprep.subr.mxu0 0.0
      %940 = vmatpush1.msra.mxu0 0.0
      %941 = vmatprep.subr.mxu0 0.0
      %942 = vmatpush1.msra.mxu0 0.0
      %943 = vmatprep.subr.mxu0 0.0
      %944 = vmatpush1.msra.mxu0 0.0
      %945 = vmatprep.subr.mxu0 0.0
      %946 = vmatpush1.msra.mxu0 0.0
      %947 = vmatprep.subr.mxu0 0.0
      %948 = vmatpush1.msra.mxu0 0.0
      %949 = vmatprep.mubr.f32.mxu0 0.0
      %950 = vmatmul.mubr.f32.gmra.mrb[0].mxu0 %v877
      %v951 = vpop.f32.mrb[0].mxu0
      %v952 = vadd.f32 0.0, %v951
      %v953 = vpop.f32.mrb[0].mxu0
      %v954 = vadd.f32 0.0, %v953
      %955 = vdwg.mxu0
      %v956 = vadd.f32 %v864, %v952
      %v957 = vadd.f32 %v866, %v954
      %v958 = vmax.f32 %v956, 0.0
      %v959 = vmax.f32 %v957, 0.0
      %v960 = vand.u32 2147483647, %v956
      %v961 = vand.u32 2147483647, %v957
      %v962 = vsub.f32 0.0, %v960
      %v963 = vsub.f32 0.0, %v961
      %v964 = vmul.f32 %v962, 1.442695
      %v965 = vpow.pop %v964
      %v966 = vmul.f32 %v963, 1.442695
      %v967 = vpow.pop %v966
      %v968 = vadd.f32 %v965, 1.0
      %v969 = vadd.f32 %v967, 1.0
      %v970 = vlog2.pop %v968
      %v971 = vmul.f32 %v970, 0.6931472
      %v972 = vlog2.pop %v969
      %v973 = vmul.f32 %v972, 0.6931472
      %v974 = vadd.f32 %v958, %v971
      %v975 = vadd.f32 %v959, %v973
      %976 = vrot.lane.b32.xlu0 %v974, 127
      %v977 = vpop.permute.xlu0 %976
      %978 = vrot.lane.b32.xlu0 %v975, 127
      %v979 = vpop.permute.xlu0 %978
      %v980 = vsel %vm308, %v977, %v979
      %v981 = vsel %vm308, %v979, %v977
      %v982 = vmax.f32 %v974, %v980
      %v983 = vmax.f32 %v975, %v981
      %v984 = vld [vmem:[%s5] sm:$0xf]
      %v985 = vld [vmem:[%s5 + $0x4] sm:$0xf]
      %v986 = vld [vmem:[%s5 + $0x8] sm:$0xf]
      %v987 = vld [vmem:[%s5 + $0xc] sm:$0xf]
      %v988 = vld [vmem:[%s5 + $0x10] sm:$0xf]
      %v989 = vld [vmem:[%s5 + $0x14] sm:$0xf]
      %v990 = vld [vmem:[%s5 + $0x18] sm:$0xf]
      %v991 = vld [vmem:[%s5 + $0x1c] sm:$0xf]
      %v992 = vld [vmem:[%s5 + $0x20] sm:$0xf]
      %v993 = vld [vmem:[%s5 + $0x24] sm:$0xf]
      %v994 = vld [vmem:[%s5 + $0x28] sm:$0xf]
      %v995 = vld [vmem:[%s5 + $0x2c] sm:$0xf]
      %v996 = vld [vmem:[%s5 + $0x30] sm:$0xf]
      %v997 = vld [vmem:[%s5 + $0x34] sm:$0xf]
      %v998 = vld [vmem:[%s5 + $0x38] sm:$0xf]
      %v999 = vld [vmem:[%s5 + $0x3c] sm:$0xf]
      %v1000 = vld [vmem:[%s5 + $0x40] sm:$0xf]
      %v1001 = vld [vmem:[%s5 + $0x44] sm:$0xf]
      %v1002 = vld [vmem:[%s5 + $0x48] sm:$0xf]
      %v1003 = vld [vmem:[%s5 + $0x4c] sm:$0xf]
      %v1004 = vld [vmem:[%s5 + $0x50] sm:$0xf]
      %v1005 = vld [vmem:[%s5 + $0x54] sm:$0xf]
      %v1006 = vld [vmem:[%s5 + $0x58] sm:$0xf]
      %v1007 = vld [vmem:[%s5 + $0x5c] sm:$0xf]
      %v1008 = vld [vmem:[%s5 + $0x60] sm:$0xf]
      %v1009 = vld [vmem:[%s5 + $0x64] sm:$0xf]
      %v1010 = vld [vmem:[%s5 + $0x68] sm:$0xf]
      %v1011 = vld [vmem:[%s5 + $0x6c] sm:$0xf]
      %v1012 = vld [vmem:[%s5 + $0x70] sm:$0xf]
      %v1013 = vld [vmem:[%s5 + $0x74] sm:$0xf]
      %v1014 = vld [vmem:[%s5 + $0x78] sm:$0xf]
      %v1015 = vld [vmem:[%s5 + $0x7c] sm:$0xf]
      %v1016 = vunpack.c.l.bf16 %v984
      %v1017 = vunpack.c.l.bf16 %v985
      %v1018 = vunpack.c.l.bf16 %v986
      %v1019 = vunpack.c.l.bf16 %v987
      %v1020 = vunpack.c.l.bf16 %v988
      %v1021 = vunpack.c.l.bf16 %v989
      %v1022 = vunpack.c.l.bf16 %v990
      %v1023 = vunpack.c.l.bf16 %v991
      %v1024 = vunpack.c.l.bf16 %v992
      %v1025 = vunpack.c.l.bf16 %v993
      %v1026 = vunpack.c.l.bf16 %v994
      %v1027 = vunpack.c.l.bf16 %v995
      %v1028 = vunpack.c.l.bf16 %v996
      %v1029 = vunpack.c.l.bf16 %v997
      %v1030 = vunpack.c.l.bf16 %v998
      %v1031 = vunpack.c.l.bf16 %v999
      %v1032 = vunpack.c.l.bf16 %v1000
      %v1033 = vunpack.c.l.bf16 %v1001
      %v1034 = vunpack.c.l.bf16 %v1002
      %v1035 = vunpack.c.l.bf16 %v1003
      %v1036 = vunpack.c.l.bf16 %v1004
      %v1037 = vunpack.c.l.bf16 %v1005
      %v1038 = vunpack.c.l.bf16 %v1006
      %v1039 = vunpack.c.l.bf16 %v1007
      %v1040 = vunpack.c.l.bf16 %v1008
      %v1041 = vunpack.c.l.bf16 %v1009
      %v1042 = vunpack.c.l.bf16 %v1010
      %v1043 = vunpack.c.l.bf16 %v1011
      %v1044 = vunpack.c.l.bf16 %v1012
      %v1045 = vunpack.c.l.bf16 %v1013
      %v1046 = vunpack.c.l.bf16 %v1014
      %v1047 = vunpack.c.l.bf16 %v1015
      %1048 = vmatprep.subr.mxu0 0.0
      %1049 = vmatpush1.msra.mxu0 %v1016
      %1050 = vmatprep.subr.mxu0 0.0
      %1051 = vmatpush1.msra.mxu0 %v1017
      %1052 = vmatprep.subr.mxu0 0.0
      %1053 = vmatpush1.msra.mxu0 %v1018
      %1054 = vmatprep.subr.mxu0 0.0
      %1055 = vmatpush1.msra.mxu0 %v1019
      %1056 = vmatprep.subr.mxu0 0.0
      %1057 = vmatpush1.msra.mxu0 %v1020
      %1058 = vmatprep.subr.mxu0 0.0
      %1059 = vmatpush1.msra.mxu0 %v1021
      %1060 = vmatprep.subr.mxu0 0.0
      %1061 = vmatpush1.msra.mxu0 %v1022
      %1062 = vmatprep.subr.mxu0 0.0
      %1063 = vmatpush1.msra.mxu0 %v1023
      %1064 = vmatprep.subr.mxu0 0.0
      %1065 = vmatpush1.msra.mxu0 %v1024
      %1066 = vmatprep.subr.mxu0 0.0
      %1067 = vmatpush1.msra.mxu0 %v1025
      %1068 = vmatprep.subr.mxu0 0.0
      %1069 = vmatpush1.msra.mxu0 %v1026
      %1070 = vmatprep.subr.mxu0 0.0
      %1071 = vmatpush1.msra.mxu0 %v1027
      %1072 = vmatprep.subr.mxu0 0.0
      %1073 = vmatpush1.msra.mxu0 %v1028
      %1074 = vmatprep.subr.mxu0 0.0
      %1075 = vmatpush1.msra.mxu0 %v1029
      %1076 = vmatprep.subr.mxu0 0.0
      %1077 = vmatpush1.msra.mxu0 %v1030
      %1078 = vmatprep.subr.mxu0 0.0
      %1079 = vmatpush1.msra.mxu0 %v1031
      %1080 = vmatprep.subr.mxu0 0.0
      %1081 = vmatpush1.msra.mxu0 %v1032
      %1082 = vmatprep.subr.mxu0 0.0
      %1083 = vmatpush1.msra.mxu0 %v1033
      %1084 = vmatprep.subr.mxu0 0.0
      %1085 = vmatpush1.msra.mxu0 %v1034
      %1086 = vmatprep.subr.mxu0 0.0
      %1087 = vmatpush1.msra.mxu0 %v1035
      %1088 = vmatprep.subr.mxu0 0.0
      %1089 = vmatpush1.msra.mxu0 %v1036
      %1090 = vmatprep.subr.mxu0 0.0
      %1091 = vmatpush1.msra.mxu0 %v1037
      %1092 = vmatprep.subr.mxu0 0.0
      %1093 = vmatpush1.msra.mxu0 %v1038
      %1094 = vmatprep.subr.mxu0 0.0
      %1095 = vmatpush1.msra.mxu0 %v1039
      %1096 = vmatprep.subr.mxu0 0.0
      %1097 = vmatpush1.msra.mxu0 %v1040
      %1098 = vmatprep.subr.mxu0 0.0
      %1099 = vmatpush1.msra.mxu0 %v1041
      %1100 = vmatprep.subr.mxu0 0.0
      %1101 = vmatpush1.msra.mxu0 %v1042
      %1102 = vmatprep.subr.mxu0 0.0
      %1103 = vmatpush1.msra.mxu0 %v1043
      %1104 = vmatprep.subr.mxu0 0.0
      %1105 = vmatpush1.msra.mxu0 %v1044
      %1106 = vmatprep.subr.mxu0 0.0
      %1107 = vmatpush1.msra.mxu0 %v1045
      %1108 = vmatprep.subr.mxu0 0.0
      %1109 = vmatpush1.msra.mxu0 %v1046
      %1110 = vmatprep.subr.mxu0 0.0
      %1111 = vmatpush1.msra.mxu0 %v1047
      %1112 = vmatprep.mubr.f32.mxu0 %v983
      %1113 = vmatmul.mubr.f32.gmra.mrb[0].mxu0 %v982
      %v1114 = vpop.f32.mrb[0].mxu0
      %v1115 = vadd.f32 0.0, %v1114
      %v1116 = vpop.f32.mrb[0].mxu0
      %1117 = vdwg.mxu0
      %v1118 = vld [vmem:[%s3] sm:$0xff]
      %1119 = vrot.lane.b32.xlu0 %v1115, 127
      %v1120 = vpop.permute.xlu0 %1119
      %s1121 = scalar_lea.vmem %s3, 8
      %v1122 = vld [vmem:[%s1121] sm:$0xff]
      %vm1123 = vcmask 31744
      %v1125 = vsel %vm1123, %v1122, 0
      %vm1127 = vcmask 1043456
      %v1129 = vsel %vm1127, %v1120, 0
      %1131 = vmatprep.subr.mxu0 0.0
      %1132 = vmatpush1.msra.mxu0 %v1129
      %1133 = vmatprep.subr.mxu0 0.0
      %1134 = vmatpush1.msra.mxu0 0.0
      %1135 = vmatprep.subr.mxu0 0.0
      %1136 = vmatpush1.msra.mxu0 0.0
      %1137 = vmatprep.subr.mxu0 0.0
      %1138 = vmatpush1.msra.mxu0 0.0
      %1139 = vmatprep.subr.mxu0 0.0
      %1140 = vmatpush1.msra.mxu0 0.0
      %1141 = vmatprep.subr.mxu0 0.0
      %1142 = vmatpush1.msra.mxu0 0.0
      %1143 = vmatprep.subr.mxu0 0.0
      %1144 = vmatpush1.msra.mxu0 0.0
      %1145 = vmatprep.subr.mxu0 0.0
      %1146 = vmatpush1.msra.mxu0 0.0
      %1147 = vmatprep.subr.mxu0 0.0
      %1148 = vmatpush1.msra.mxu0 0.0
      %1149 = vmatprep.subr.mxu0 0.0
      %1150 = vmatpush1.msra.mxu0 0.0
      %1151 = vmatprep.subr.mxu0 0.0
      %1152 = vmatpush1.msra.mxu0 0.0
      %1153 = vmatprep.subr.mxu0 0.0
      %1154 = vmatpush1.msra.mxu0 0.0
      %1155 = vmatprep.subr.mxu0 0.0
      %1156 = vmatpush1.msra.mxu0 0.0
      %1157 = vmatprep.subr.mxu0 0.0
      %1158 = vmatpush1.msra.mxu0 0.0
      %1159 = vmatprep.subr.mxu0 0.0
      %1160 = vmatpush1.msra.mxu0 0.0
      %1161 = vmatprep.subr.mxu0 0.0
      %1162 = vmatpush1.msra.mxu0 0.0
      %1163 = vmatprep.subr.mxu0 0.0
      %1164 = vmatpush1.msra.mxu0 0.0
      %1165 = vmatprep.subr.mxu0 0.0
      %1166 = vmatpush1.msra.mxu0 0.0
      %1167 = vmatprep.subr.mxu0 0.0
      %1168 = vmatpush1.msra.mxu0 0.0
      %1169 = vmatprep.subr.mxu0 0.0
      %1170 = vmatpush1.msra.mxu0 0.0
      %1171 = vmatprep.subr.mxu0 0.0
      %1172 = vmatpush1.msra.mxu0 0.0
      %1173 = vmatprep.subr.mxu0 0.0
      %1174 = vmatpush1.msra.mxu0 0.0
      %1175 = vmatprep.subr.mxu0 0.0
      %1176 = vmatpush1.msra.mxu0 0.0
      %1177 = vmatprep.subr.mxu0 0.0
      %1178 = vmatpush1.msra.mxu0 0.0
      %1179 = vmatprep.subr.mxu0 0.0
      %1180 = vmatpush1.msra.mxu0 0.0
      %1181 = vmatprep.subr.mxu0 0.0
      %1182 = vmatpush1.msra.mxu0 0.0
      %1183 = vmatprep.subr.mxu0 0.0
      %1184 = vmatpush1.msra.mxu0 0.0
      %1185 = vmatprep.subr.mxu0 0.0
      %1186 = vmatpush1.msra.mxu0 0.0
      %1187 = vmatprep.subr.mxu0 0.0
      %1188 = vmatpush1.msra.mxu0 0.0
      %1189 = vmatprep.subr.mxu0 0.0
      %1190 = vmatpush1.msra.mxu0 0.0
      %1191 = vmatprep.subr.mxu0 0.0
      %1192 = vmatpush1.msra.mxu0 0.0
      %1193 = vmatprep.subr.mxu0 0.0
      %1194 = vmatpush1.msra.mxu0 0.0
      %1195 = vmatprep.mubr.f32.mxu0 0.0
      %1196 = vmatmul.mubr.f32.gmra.mrb[0].mxu0 %v1125
      %v1197 = vpop.f32.mrb[0].mxu0
      %v1198 = vadd.f32 0.0, %v1197
      %v1199 = vpop.f32.mrb[0].mxu0
      %1200 = vdwg.mxu0
      %v1202 = vsel %vm1123, %v1118, 0
      %v1205 = vsel %vm1127, %v1115, 0
      %1207 = vmatprep.subr.mxu0 0.0
      %1208 = vmatpush1.msra.mxu0 %v1205
      %1209 = vmatprep.subr.mxu0 0.0
      %1210 = vmatpush1.msra.mxu0 0.0
      %1211 = vmatprep.subr.mxu0 0.0
      %1212 = vmatpush1.msra.mxu0 0.0
      %1213 = vmatprep.subr.mxu0 0.0
      %1214 = vmatpush1.msra.mxu0 0.0
      %1215 = vmatprep.subr.mxu0 0.0
      %1216 = vmatpush1.msra.mxu0 0.0
      %1217 = vmatprep.subr.mxu0 0.0
      %1218 = vmatpush1.msra.mxu0 0.0
      %1219 = vmatprep.subr.mxu0 0.0
      %1220 = vmatpush1.msra.mxu0 0.0
      %1221 = vmatprep.subr.mxu0 0.0
      %1222 = vmatpush1.msra.mxu0 0.0
      %1223 = vmatprep.subr.mxu0 0.0
      %1224 = vmatpush1.msra.mxu0 0.0
      %1225 = vmatprep.subr.mxu0 0.0
      %1226 = vmatpush1.msra.mxu0 0.0
      %1227 = vmatprep.subr.mxu0 0.0
      %1228 = vmatpush1.msra.mxu0 0.0
      %1229 = vmatprep.subr.mxu0 0.0
      %1230 = vmatpush1.msra.mxu0 0.0
      %1231 = vmatprep.subr.mxu0 0.0
      %1232 = vmatpush1.msra.mxu0 0.0
      %1233 = vmatprep.subr.mxu0 0.0
      %1234 = vmatpush1.msra.mxu0 0.0
      %1235 = vmatprep.subr.mxu0 0.0
      %1236 = vmatpush1.msra.mxu0 0.0
      %1237 = vmatprep.subr.mxu0 0.0
      %1238 = vmatpush1.msra.mxu0 0.0
      %1239 = vmatprep.subr.mxu0 0.0
      %1240 = vmatpush1.msra.mxu0 0.0
      %1241 = vmatprep.subr.mxu0 0.0
      %1242 = vmatpush1.msra.mxu0 0.0
      %1243 = vmatprep.subr.mxu0 0.0
      %1244 = vmatpush1.msra.mxu0 0.0
      %1245 = vmatprep.subr.mxu0 0.0
      %1246 = vmatpush1.msra.mxu0 0.0
      %1247 = vmatprep.subr.mxu0 0.0
      %1248 = vmatpush1.msra.mxu0 0.0
      %1249 = vmatprep.subr.mxu0 0.0
      %1250 = vmatpush1.msra.mxu0 0.0
      %1251 = vmatprep.subr.mxu0 0.0
      %1252 = vmatpush1.msra.mxu0 0.0
      %1253 = vmatprep.subr.mxu0 0.0
      %1254 = vmatpush1.msra.mxu0 0.0
      %1255 = vmatprep.subr.mxu0 0.0
      %1256 = vmatpush1.msra.mxu0 0.0
      %1257 = vmatprep.subr.mxu0 0.0
      %1258 = vmatpush1.msra.mxu0 0.0
      %1259 = vmatprep.subr.mxu0 0.0
      %1260 = vmatpush1.msra.mxu0 0.0
      %1261 = vmatprep.subr.mxu0 0.0
      %1262 = vmatpush1.msra.mxu0 0.0
      %1263 = vmatprep.subr.mxu0 0.0
      %1264 = vmatpush1.msra.mxu0 0.0
      %1265 = vmatprep.subr.mxu0 0.0
      %1266 = vmatpush1.msra.mxu0 0.0
      %1267 = vmatprep.subr.mxu0 0.0
      %1268 = vmatpush1.msra.mxu0 0.0
      %1269 = vmatprep.subr.mxu0 0.0
      %1270 = vmatpush1.msra.mxu0 0.0
      %1271 = vmatprep.mubr.f32.mxu0 0.0
      %1272 = vmatmul.mubr.f32.gmra.mrb[0].mxu0 %v1202
      %v1273 = vpop.f32.mrb[0].mxu0
      %v1274 = vadd.f32 %v1198, %v1273
      %v1275 = vpop.f32.mrb[0].mxu0
      %1276 = vdwg.mxu0
      %1277 = vrot.lane.b32.xlu0 %v1115, 126
      %v1278 = vpop.permute.xlu0 %1277
      %s1279 = scalar_lea.vmem %s3, 16
      %v1280 = vld [vmem:[%s1279] sm:$0xff]
      %v1282 = vsel %vm1123, %v1280, 0
      %v1285 = vsel %vm1127, %v1278, 0
      %1287 = vmatprep.subr.mxu0 0.0
      %1288 = vmatpush1.msra.mxu0 %v1285
      %1289 = vmatprep.subr.mxu0 0.0
      %1290 = vmatpush1.msra.mxu0 0.0
      %1291 = vmatprep.subr.mxu0 0.0
      %1292 = vmatpush1.msra.mxu0 0.0
      %1293 = vmatprep.subr.mxu0 0.0
      %1294 = vmatpush1.msra.mxu0 0.0
      %1295 = vmatprep.subr.mxu0 0.0
      %1296 = vmatpush1.msra.mxu0 0.0
      %1297 = vmatprep.subr.mxu0 0.0
      %1298 = vmatpush1.msra.mxu0 0.0
      %1299 = vmatprep.subr.mxu0 0.0
      %1300 = vmatpush1.msra.mxu0 0.0
      %1301 = vmatprep.subr.mxu0 0.0
      %1302 = vmatpush1.msra.mxu0 0.0
      %1303 = vmatprep.subr.mxu0 0.0
      %1304 = vmatpush1.msra.mxu0 0.0
      %1305 = vmatprep.subr.mxu0 0.0
      %1306 = vmatpush1.msra.mxu0 0.0
      %1307 = vmatprep.subr.mxu0 0.0
      %1308 = vmatpush1.msra.mxu0 0.0
      %1309 = vmatprep.subr.mxu0 0.0
      %1310 = vmatpush1.msra.mxu0 0.0
      %1311 = vmatprep.subr.mxu0 0.0
      %1312 = vmatpush1.msra.mxu0 0.0
      %1313 = vmatprep.subr.mxu0 0.0
      %1314 = vmatpush1.msra.mxu0 0.0
      %1315 = vmatprep.subr.mxu0 0.0
      %1316 = vmatpush1.msra.mxu0 0.0
      %1317 = vmatprep.subr.mxu0 0.0
      %1318 = vmatpush1.msra.mxu0 0.0
      %1319 = vmatprep.subr.mxu0 0.0
      %1320 = vmatpush1.msra.mxu0 0.0
      %1321 = vmatprep.subr.mxu0 0.0
      %1322 = vmatpush1.msra.mxu0 0.0
      %1323 = vmatprep.subr.mxu0 0.0
      %1324 = vmatpush1.msra.mxu0 0.0
      %1325 = vmatprep.subr.mxu0 0.0
      %1326 = vmatpush1.msra.mxu0 0.0
      %1327 = vmatprep.subr.mxu0 0.0
      %1328 = vmatpush1.msra.mxu0 0.0
      %1329 = vmatprep.subr.mxu0 0.0
      %1330 = vmatpush1.msra.mxu0 0.0
      %1331 = vmatprep.subr.mxu0 0.0
      %1332 = vmatpush1.msra.mxu0 0.0
      %1333 = vmatprep.subr.mxu0 0.0
      %1334 = vmatpush1.msra.mxu0 0.0
      %1335 = vmatprep.subr.mxu0 0.0
      %1336 = vmatpush1.msra.mxu0 0.0
      %1337 = vmatprep.subr.mxu0 0.0
      %1338 = vmatpush1.msra.mxu0 0.0
      %1339 = vmatprep.subr.mxu0 0.0
      %1340 = vmatpush1.msra.mxu0 0.0
      %1341 = vmatprep.subr.mxu0 0.0
      %1342 = vmatpush1.msra.mxu0 0.0
      %1343 = vmatprep.subr.mxu0 0.0
      %1344 = vmatpush1.msra.mxu0 0.0
      %1345 = vmatprep.subr.mxu0 0.0
      %1346 = vmatpush1.msra.mxu0 0.0
      %1347 = vmatprep.subr.mxu0 0.0
      %1348 = vmatpush1.msra.mxu0 0.0
      %1349 = vmatprep.subr.mxu0 0.0
      %1350 = vmatpush1.msra.mxu0 0.0
      %1351 = vmatprep.mubr.f32.mxu0 0.0
      %1352 = vmatmul.mubr.f32.gmra.mrb[0].mxu0 %v1282
      %v1353 = vpop.f32.mrb[0].mxu0
      %v1354 = vadd.f32 0.0, %v1353
      %v1355 = vpop.f32.mrb[0].mxu0
      %1356 = vdwg.mxu0
      %v1357 = vadd.f32 %v1274, %v1354
      %v1358 = vmax.f32 %v1357, 0.0
      %v1359 = vand.u32 2147483647, %v1357
      %v1360 = vsub.f32 0.0, %v1359
      %v1361 = vmul.f32 %v1360, 1.442695
      %v1362 = vpow.pop %v1361
      %v1363 = vadd.f32 %v1362, 1.0
      %v1364 = vlog2.pop %v1363
      %v1365 = vmul.f32 %v1364, 0.6931472
      %v1366 = vadd.f32 %v1358, %v1365
      %1367 = vrot.lane.b32.xlu0 %v1366, 127
      %v1368 = vpop.permute.xlu0 %1367
      %v1369 = vmax.f32 %v1366, %v1368
      %v1370 = vld [vmem:[%s6] sm:$0xf]
      %v1371 = vld [vmem:[%s6 + $0x4] sm:$0xf]
      %v1372 = vld [vmem:[%s6 + $0x8] sm:$0xf]
      %v1373 = vld [vmem:[%s6 + $0xc] sm:$0xf]
      %v1374 = vld [vmem:[%s6 + $0x10] sm:$0xf]
      %v1375 = vld [vmem:[%s6 + $0x14] sm:$0xf]
      %v1376 = vld [vmem:[%s6 + $0x18] sm:$0xf]
      %v1377 = vld [vmem:[%s6 + $0x1c] sm:$0xf]
      %v1378 = vld [vmem:[%s6 + $0x20] sm:$0xf]
      %v1379 = vld [vmem:[%s6 + $0x24] sm:$0xf]
      %v1380 = vld [vmem:[%s6 + $0x28] sm:$0xf]
      %v1381 = vld [vmem:[%s6 + $0x2c] sm:$0xf]
      %v1382 = vld [vmem:[%s6 + $0x30] sm:$0xf]
      %v1383 = vld [vmem:[%s6 + $0x34] sm:$0xf]
      %v1384 = vld [vmem:[%s6 + $0x38] sm:$0xf]
      %v1385 = vld [vmem:[%s6 + $0x3c] sm:$0xf]
      %v1386 = vunpack.c.l.bf16 %v1370
      %v1387 = vunpack.c.l.bf16 %v1371
      %v1388 = vunpack.c.l.bf16 %v1372
      %v1389 = vunpack.c.l.bf16 %v1373
      %v1390 = vunpack.c.l.bf16 %v1374
      %v1391 = vunpack.c.l.bf16 %v1375
      %v1392 = vunpack.c.l.bf16 %v1376
      %v1393 = vunpack.c.l.bf16 %v1377
      %v1394 = vunpack.c.l.bf16 %v1378
      %v1395 = vunpack.c.l.bf16 %v1379
      %v1396 = vunpack.c.l.bf16 %v1380
      %v1397 = vunpack.c.l.bf16 %v1381
      %v1398 = vunpack.c.l.bf16 %v1382
      %v1399 = vunpack.c.l.bf16 %v1383
      %v1400 = vunpack.c.l.bf16 %v1384
      %v1401 = vunpack.c.l.bf16 %v1385
      %1402 = vmatprep.subr.mxu0 0.0
      %1403 = vmatpush1.msra.mxu0 %v1386
      %1404 = vmatprep.subr.mxu0 0.0
      %1405 = vmatpush1.msra.mxu0 %v1387
      %1406 = vmatprep.subr.mxu0 0.0
      %1407 = vmatpush1.msra.mxu0 %v1388
      %1408 = vmatprep.subr.mxu0 0.0
      %1409 = vmatpush1.msra.mxu0 %v1389
      %1410 = vmatprep.subr.mxu0 0.0
      %1411 = vmatpush1.msra.mxu0 %v1390
      %1412 = vmatprep.subr.mxu0 0.0
      %1413 = vmatpush1.msra.mxu0 %v1391
      %1414 = vmatprep.subr.mxu0 0.0
      %1415 = vmatpush1.msra.mxu0 %v1392
      %1416 = vmatprep.subr.mxu0 0.0
      %1417 = vmatpush1.msra.mxu0 %v1393
      %1418 = vmatprep.subr.mxu0 0.0
      %1419 = vmatpush1.msra.mxu0 %v1394
      %1420 = vmatprep.subr.mxu0 0.0
      %1421 = vmatpush1.msra.mxu0 %v1395
      %1422 = vmatprep.subr.mxu0 0.0
      %1423 = vmatpush1.msra.mxu0 %v1396
      %1424 = vmatprep.subr.mxu0 0.0
      %1425 = vmatpush1.msra.mxu0 %v1397
      %1426 = vmatprep.subr.mxu0 0.0
      %1427 = vmatpush1.msra.mxu0 %v1398
      %1428 = vmatprep.subr.mxu0 0.0
      %1429 = vmatpush1.msra.mxu0 %v1399
      %1430 = vmatprep.subr.mxu0 0.0
      %1431 = vmatpush1.msra.mxu0 %v1400
      %1432 = vmatprep.subr.mxu0 0.0
      %1433 = vmatpush1.msra.mxu0 %v1401
      %1434 = vmatprep.subr.mxu0 0.0
      %1435 = vmatpush1.msra.mxu0 0.0
      %1436 = vmatprep.subr.mxu0 0.0
      %1437 = vmatpush1.msra.mxu0 0.0
      %1438 = vmatprep.subr.mxu0 0.0
      %1439 = vmatpush1.msra.mxu0 0.0
      %1440 = vmatprep.subr.mxu0 0.0
      %1441 = vmatpush1.msra.mxu0 0.0
      %1442 = vmatprep.subr.mxu0 0.0
      %1443 = vmatpush1.msra.mxu0 0.0
      %1444 = vmatprep.subr.mxu0 0.0
      %1445 = vmatpush1.msra.mxu0 0.0
      %1446 = vmatprep.subr.mxu0 0.0
      %1447 = vmatpush1.msra.mxu0 0.0
      %1448 = vmatprep.subr.mxu0 0.0
      %1449 = vmatpush1.msra.mxu0 0.0
      %1450 = vmatprep.subr.mxu0 0.0
      %1451 = vmatpush1.msra.mxu0 0.0
      %1452 = vmatprep.subr.mxu0 0.0
      %1453 = vmatpush1.msra.mxu0 0.0
      %1454 = vmatprep.subr.mxu0 0.0
      %1455 = vmatpush1.msra.mxu0 0.0
      %1456 = vmatprep.subr.mxu0 0.0
      %1457 = vmatpush1.msra.mxu0 0.0
      %1458 = vmatprep.subr.mxu0 0.0
      %1459 = vmatpush1.msra.mxu0 0.0
      %1460 = vmatprep.subr.mxu0 0.0
      %1461 = vmatpush1.msra.mxu0 0.0
      %1462 = vmatprep.subr.mxu0 0.0
      %1463 = vmatpush1.msra.mxu0 0.0
      %1464 = vmatprep.subr.mxu0 0.0
      %1465 = vmatpush1.msra.mxu0 0.0
      %1466 = vmatprep.mubr.f32.mxu0 0.0
      %1467 = vmatmul.mubr.f32.gmra.mrb[0].mxu0 %v1369
      %v1468 = vpop.f32.mrb[0].mxu0
      %v1469 = vadd.f32 0.0, %v1468
      %v1470 = vpop.f32.mrb[0].mxu0
      %1471 = vdwg.mxu0
      %1472 = vst [vmem:[%s273] sm:$0xff] %v1469
      %p1473 = scmp.lt.s32.totalorder %s18, 1
      %s1474 = scalar_select %p1473, %s18, 1
      %s1475 = smul.addr %s1474, 8
      %s1476 = scalar_lea.vmem %s7, %s1475
      // Predicated region
      $region49: #{oned_stack_forward.1} parent=47 // pred_check
        %p1477 = pneg %p188
      $region50: #{oned_stack_forward.1} parent=47 // pred_check_branch
        %1479 = sbr.rel (%p1477) target = $region52
      $region51: #{oned_stack_forward.1} parent=47 // pred_region
        _
      $region52: #{oned_stack_forward.1} parent=47 // pred_fallthru
        _
    $region48: #{oned_stack_forward.1} parent=5 // pred_fallthru
      _
    %p1480 = scmp.le.s32.totalorder 2, %s13
    // Predicated region
    $region53: #{oned_stack_forward.1} parent=5 // pred_check
      %p1481 = pneg %p1480
    $region54: #{oned_stack_forward.1} parent=5 // pred_check_branch
      %1483 = sbr.rel (%p1481) target = $region56
    $region55: #{oned_stack_forward.1} parent=5 // pred_region
      %s1484 = ssub.s32 %s13, 2
      // Predicated region
      $region57: #{oned_stack_forward.1} parent=55 // pred_check
        %p1485 = pneg %p194
      $region58: #{oned_stack_forward.1} parent=55 // pred_check_branch
        %1487 = sbr.rel (%p1485) target = $region60
      $region59: #{oned_stack_forward.1} parent=55 // pred_region
        %p1488 = scmp.lt.s32.totalorder %s19, 1
        %s1489 = scalar_select %p1488, %s19, 1
        %s1490 = smul.addr %s1489, 8
        %s1491 = scalar_lea.vmem %s7, %s1490
      $region60: #{oned_stack_forward.1} parent=55 // pred_fallthru
        _
    $region56: #{oned_stack_forward.1} parent=5 // pred_fallthru
      _
  $region6: #{oned_stack_forward.1} parent=0 // loop_footer
    %s17 = sadd.s32 1, %s13
  $region7: #{oned_stack_forward.1} parent=0 // loop_footer_branch
    %12 = sbr.rel target = $region3
  $region8: #{oned_stack_forward.1} parent=0 // loop_exit
    _

</llo_original>
